<compile_context>
chip_gen: v7x
topology: tpu7x:2x2x1
jax: 0.10.0
libtpu: 0.0.40
codegen_flags: <defaults>
</compile_context>

<pallas_src>
import jax
import jax.numpy as jnp
from jax.experimental import pallas as pl
from jax.experimental.pallas import tpu as pltpu

# module hyper-params (from the PyTorch script)
batch_size = 1
hidden_size = 5
input_size = 5
num_classes = 5
num_layers = 1
seq_len = 8  # small sequence length for the example

_LANE = 128   # lane tile (last dim)
_SUBLANE = 8  # sublane tile (second-to-last dim, f32)


def _round_up(x, m):
    return ((x + m - 1) // m) * m


def gru_kernel(x_ref, h0_ref, wi_ref, wh_ref, bi_ref, bh_ref, out_ref, gi_scr):
    """Whole GRU forward in one kernel invocation.

    x_ref : (S*Bp, Ip)    all timesteps, flattened (t major, batch minor)
    h0_ref: (Bp, Hp)      initial hidden state
    wi_ref: (Ip, 3*Hp)    input->hidden weights, gates [r|z|n] along lanes
    wh_ref: (Hp, 3*Hp)    hidden->hidden weights, gates [r|z|n] along lanes
    bi_ref: (1, 3*Hp)     input biases
    bh_ref: (1, 3*Hp)     hidden biases
    out_ref:(S*Bp, Hp)    hidden state for every timestep
    gi_scr: (S*Bp, 3*Hp)  VMEM scratch for the precomputed input projections
    """
    SB, _ = x_ref.shape
    Bp, Hp = h0_ref.shape
    S = SB // Bp

    # ---- Phase 1 (non-recurrent): one big MXU matmul for all timesteps ----
    gi_scr[...] = (
        jnp.dot(x_ref[...], wi_ref[...], preferred_element_type=jnp.float32)
        + bi_ref[...]
    )

    # Loop-invariant operands: load once, reuse every step.
    wh = wh_ref[...]            # (Hp, 3*Hp)
    bh = bh_ref[...]            # (1, 3*Hp)

    # ---- Phase 2 (recurrent): one fused (Bp, 3*Hp) matmul per step ----
    def step(t, h):
        base = pl.multiple_of(t * Bp, Bp)
        gi = gi_scr[pl.ds(base, Bp), :]                                # (Bp, 3*Hp)
        gh = jnp.dot(h, wh, preferred_element_type=jnp.float32) + bh   # (Bp, 3*Hp)

        r = jax.nn.sigmoid(gi[:, 0:Hp] + gh[:, 0:Hp])
        z = jax.nn.sigmoid(gi[:, Hp:2 * Hp] + gh[:, Hp:2 * Hp])
        n = jnp.tanh(gi[:, 2 * Hp:] + r * gh[:, 2 * Hp:])
        h_new = (1.0 - z) * n + z * h

        out_ref[pl.ds(base, Bp), :] = h_new.astype(out_ref.dtype)
        return h_new

    jax.lax.fori_loop(0, S, step, h0_ref[...].astype(jnp.float32), unroll=True)


def gru_forward(x, h0, weight_ih, weight_hh, bias_ih, bias_hh):
    """x: (S, B, I), h0: (1, B, H). Returns (S*B, H) like `output.view(-1, hidden)`."""
    S, B, I = x.shape
    H = h0.shape[-1]
    dtype = jnp.float32

    # Pad to hardware tiles: lanes -> 128, batch/sublanes -> 8.
    Hp = _round_up(max(H, 1), _LANE)
    Ip = _round_up(max(I, 1), _LANE)
    Bp = _round_up(max(B, 1), _SUBLANE)

    # Activations / initial state, zero padded (padding stays zero & inert).
    x_pad = jnp.zeros((S, Bp, Ip), dtype).at[:, :B, :I].set(x)
    x_flat = x_pad.reshape(S * Bp, Ip)
    h0_pad = jnp.zeros((Bp, Hp), dtype).at[:B, :H].set(h0[0])

    # Rearrange PyTorch-layout params (3H, I)/(3H, H)/(3H,) into fused,
    # lane-contiguous (in, 3*Hp) matrices with gate order [r | z | n].
    wi_pad = jnp.zeros((Ip, 3 * Hp), dtype)
    wh_pad = jnp.zeros((Hp, 3 * Hp), dtype)
    bi_pad = jnp.zeros((1, 3 * Hp), dtype)
    bh_pad = jnp.zeros((1, 3 * Hp), dtype)
    for g in range(3):
        wi_g = weight_ih[g * H:(g + 1) * H, :]       # (H, I)
        wh_g = weight_hh[g * H:(g + 1) * H, :]       # (H, H)
        wi_pad = wi_pad.at[:I, g * Hp:g * Hp + H].set(wi_g.T)
        wh_pad = wh_pad.at[:H, g * Hp:g * Hp + H].set(wh_g.T)
        bi_pad = bi_pad.at[0, g * Hp:g * Hp + H].set(bias_ih[g * H:(g + 1) * H])
        bh_pad = bh_pad.at[0, g * Hp:g * Hp + H].set(bias_hh[g * H:(g + 1) * H])

    # Single kernel invocation: everything fits comfortably in VMEM at these
    # sizes, so no grid / pipelining is needed (weights are loaded exactly once).
    # TODO(synk): for a real batch (or bidirectional/multi-layer GRU), add a
    # leading "parallel" grid axis over batch to use the 2nd TensorCore on v7x.
    out_flat = pl.pallas_call(
        gru_kernel,
        out_shape=jax.ShapeDtypeStruct((S * Bp, Hp), dtype),
        scratch_shapes=[pltpu.VMEM((S * Bp, 3 * Hp), jnp.float32)],
    )(x_flat, h0_pad, wi_pad, wh_pad, bi_pad, bh_pad)

    out = out_flat.reshape(S, Bp, Hp)[:, :B, :H]
    return out.reshape(-1, H)


def gru_reference(x, h0, weight_ih, weight_hh, bias_ih, bias_hh):
    """Pure-JAX reference matching torch.nn.GRU forward (1 layer)."""
    H = h0.shape[-1]
    w_ir, w_iz, w_in = jnp.split(weight_ih, 3, axis=0)
    w_hr, w_hz, w_hn = jnp.split(weight_hh, 3, axis=0)
    b_ir, b_iz, b_in = jnp.split(bias_ih, 3)
    b_hr, b_hz, b_hn = jnp.split(bias_hh, 3)

    def step(h, x_t):
        r = jax.nn.sigmoid(x_t @ w_ir.T + b_ir + h @ w_hr.T + b_hr)
        z = jax.nn.sigmoid(x_t @ w_iz.T + b_iz + h @ w_hz.T + b_hz)
        n = jnp.tanh(x_t @ w_in.T + b_in + r * (h @ w_hn.T + b_hn))
        h_new = (1.0 - z) * n + z * h
        return h_new, h_new

    _, ys = jax.lax.scan(step, h0[0], x)
    return ys.reshape(-1, H)


if __name__ == "__main__":
    key = jax.random.PRNGKey(0)
    k_x, k_h0, k_wih, k_whh, k_bih, k_bhh = jax.random.split(key, 6)

    # deterministic parameter init (PyTorch-style U(-1/sqrt(H), 1/sqrt(H)))
    bound = 1.0 / (hidden_size ** 0.5)
    weight_ih = jax.random.uniform(
        k_wih, (3 * hidden_size, input_size), jnp.float32, -bound, bound)
    weight_hh = jax.random.uniform(
        k_whh, (3 * hidden_size, hidden_size), jnp.float32, -bound, bound)
    bias_ih = jax.random.uniform(k_bih, (3 * hidden_size,), jnp.float32, -bound, bound)
    bias_hh = jax.random.uniform(k_bhh, (3 * hidden_size,), jnp.float32, -bound, bound)

    # inputs: (seq_len, batch, input_size); h0 ~ randn as in the PyTorch forward
    x = jax.random.normal(k_x, (seq_len, batch_size, input_size), jnp.float32)
    h0 = jax.random.normal(k_h0, (num_layers, batch_size, hidden_size), jnp.float32)

    out = gru_forward(x, h0, weight_ih, weight_hh, bias_ih, bias_hh)
    out = jax.block_until_ready(out)

    ref = gru_reference(x, h0, weight_ih, weight_hh, bias_ih, bias_hh)
    assert out.shape == (seq_len * batch_size, hidden_size), out.shape
    assert jnp.allclose(out, ref, atol=1e-5, rtol=1e-5), "mismatch vs reference"

    print("KERNEL_OK")
</pallas_src>

<mosaic_0001>
module attributes {stable_mosaic.version = 11 : i64} {
  func.func @gru_kernel(%arg0: memref<64x128xf32, #tpu.memory_space<vmem>>, %arg1: memref<8x128xf32, #tpu.memory_space<vmem>>, %arg2: memref<128x384xf32, #tpu.memory_space<vmem>>, %arg3: memref<128x384xf32, #tpu.memory_space<vmem>>, %arg4: memref<1x384xf32, #tpu.memory_space<vmem>>, %arg5: memref<1x384xf32, #tpu.memory_space<vmem>>, %arg6: memref<64x128xf32, #tpu.memory_space<vmem>>, %arg7: memref<64x384xf32, #tpu.memory_space<vmem>>) attributes {dimension_semantics = [], scalar_prefetch = 0 : i64, scratch_operands = 1 : i64, tpu.core_type = #tpu.core_type<tc>} {
    %c0 = arith.constant 0 : index
    %c0_0 = arith.constant 0 : index
    %0 = vector.load %arg0[%c0, %c0_0] : memref<64x128xf32, #tpu.memory_space<vmem>>, vector<64x128xf32>
    %c0_1 = arith.constant 0 : index
    %c0_2 = arith.constant 0 : index
    %1 = vector.load %arg2[%c0_1, %c0_2] : memref<128x384xf32, #tpu.memory_space<vmem>>, vector<128x384xf32>
    %cst = arith.constant dense<0.000000e+00> : vector<64x384xf32>
    %2 = tpu.matmul %0, %1, %cst {dimension_numbers = #tpu.dot_dimension_numbers<[1], [0], [0], [1], [0, 0, 1, 1], [], []>} : vector<64x128xf32>, vector<128x384xf32>, vector<64x384xf32> -> vector<64x384xf32>
    %c0_3 = arith.constant 0 : index
    %c0_4 = arith.constant 0 : index
    %3 = vector.load %arg4[%c0_3, %c0_4] : memref<1x384xf32, #tpu.memory_space<vmem>>, vector<1x384xf32>
    %4 = vector.broadcast %3 : vector<1x384xf32> to vector<64x384xf32>
    %5 = arith.addf %2, %4 : vector<64x384xf32>
    %c0_5 = arith.constant 0 : index
    %c0_6 = arith.constant 0 : index
    %6 = vector.load %arg7[%c0_5, %c0_6] : memref<64x384xf32, #tpu.memory_space<vmem>>, vector<64x384xf32>
    tpu.vector_store %arg7[%c0_5, %c0_6], %5 {strides = array<i32>} : memref<64x384xf32, #tpu.memory_space<vmem>>, vector<64x384xf32>,
    %c0_7 = arith.constant 0 : index
    %c0_8 = arith.constant 0 : index
    %7 = vector.load %arg3[%c0_7, %c0_8] : memref<128x384xf32, #tpu.memory_space<vmem>>, vector<128x384xf32>
    %c0_9 = arith.constant 0 : index
    %c0_10 = arith.constant 0 : index
    %8 = vector.load %arg5[%c0_9, %c0_10] : memref<1x384xf32, #tpu.memory_space<vmem>>, vector<1x384xf32>
    %c0_11 = arith.constant 0 : index
    %c0_12 = arith.constant 0 : index
    %9 = vector.load %arg1[%c0_11, %c0_12] : memref<8x128xf32, #tpu.memory_space<vmem>>, vector<8x128xf32>
    %c0_i32 = arith.constant 0 : i32
    %c8_i32 = arith.constant 8 : i32
    %10 = arith.muli %c0_i32, %c8_i32 : i32
    %11 = tpu.assume_multiple %10, 8 : i32
    %12 = arith.index_cast %11 : i32 to index
    %c0_13 = arith.constant 0 : index
    %13 = vector.load %arg7[%12, %c0_13] : memref<64x384xf32, #tpu.memory_space<vmem>>, vector<8x384xf32>
    %cst_14 = arith.constant dense<0.000000e+00> : vector<8x384xf32>
    %14 = tpu.matmul %9, %7, %cst_14 {dimension_numbers = #tpu.dot_dimension_numbers<[1], [0], [0], [1], [0, 0, 1, 1], [], []>} : vector<8x128xf32>, vector<128x384xf32>, vector<8x384xf32> -> vector<8x384xf32>
    %15 = vector.broadcast %8 : vector<1x384xf32> to vector<8x384xf32>
    %16 = arith.addf %14, %15 : vector<8x384xf32>
    %17 = vector.extract_strided_slice %13 {offsets = [0, 0], sizes = [8, 128], strides = [1, 1]} : vector<8x384xf32> to vector<8x128xf32>
    %18 = vector.extract_strided_slice %16 {offsets = [0, 0], sizes = [8, 128], strides = [1, 1]} : vector<8x384xf32> to vector<8x128xf32>
    %19 = arith.addf %17, %18 : vector<8x128xf32>
    %20 = arith.negf %19 : vector<8x128xf32>
    %21 = math.exp %20 : vector<8x128xf32>
    %cst_15 = arith.constant 1.000000e+00 : f32
    %22 = vector.broadcast %cst_15 : f32 to vector<8x128xf32>
    %23 = arith.addf %22, %21 : vector<8x128xf32>
    %24 = arith.divf %22, %23 : vector<8x128xf32>
    %25 = vector.extract_strided_slice %13 {offsets = [0, 128], sizes = [8, 128], strides = [1, 1]} : vector<8x384xf32> to vector<8x128xf32>
    %26 = vector.extract_strided_slice %16 {offsets = [0, 128], sizes = [8, 128], strides = [1, 1]} : vector<8x384xf32> to vector<8x128xf32>
    %27 = arith.addf %25, %26 : vector<8x128xf32>
    %28 = arith.negf %27 : vector<8x128xf32>
    %29 = math.exp %28 : vector<8x128xf32>
    %cst_16 = arith.constant 1.000000e+00 : f32
    %30 = vector.broadcast %cst_16 : f32 to vector<8x128xf32>
    %31 = arith.addf %30, %29 : vector<8x128xf32>
    %32 = arith.divf %30, %31 : vector<8x128xf32>
    %33 = vector.extract_strided_slice %13 {offsets = [0, 256], sizes = [8, 128], strides = [1, 1]} : vector<8x384xf32> to vector<8x128xf32>
    %34 = vector.extract_strided_slice %16 {offsets = [0, 256], sizes = [8, 128], strides = [1, 1]} : vector<8x384xf32> to vector<8x128xf32>
    %35 = arith.mulf %24, %34 : vector<8x128xf32>
    %36 = arith.addf %33, %35 : vector<8x128xf32>
    %37 = math.tanh %36 : vector<8x128xf32>
    %cst_17 = arith.constant 1.000000e+00 : f32
    %38 = vector.broadcast %cst_17 : f32 to vector<8x128xf32>
    %39 = arith.subf %38, %32 : vector<8x128xf32>
    %40 = arith.mulf %39, %37 : vector<8x128xf32>
    %41 = arith.mulf %32, %9 : vector<8x128xf32>
    %42 = arith.addf %40, %41 : vector<8x128xf32>
    %43 = arith.index_cast %11 : i32 to index
    %c0_18 = arith.constant 0 : index
    %44 = vector.load %arg6[%43, %c0_18] : memref<64x128xf32, #tpu.memory_space<vmem>>, vector<8x128xf32>
    tpu.vector_store %arg6[%43, %c0_18], %42 {strides = array<i32>} : memref<64x128xf32, #tpu.memory_space<vmem>>, vector<8x128xf32>,
    %c1_i32 = arith.constant 1 : i32
    %c8_i32_19 = arith.constant 8 : i32
    %45 = arith.muli %c1_i32, %c8_i32_19 : i32
    %46 = tpu.assume_multiple %45, 8 : i32
    %47 = arith.index_cast %46 : i32 to index
    %c0_20 = arith.constant 0 : index
    %48 = vector.load %arg7[%47, %c0_20] : memref<64x384xf32, #tpu.memory_space<vmem>>, vector<8x384xf32>
    %cst_21 = arith.constant dense<0.000000e+00> : vector<8x384xf32>
    %49 = tpu.matmul %42, %7, %cst_21 {dimension_numbers = #tpu.dot_dimension_numbers<[1], [0], [0], [1], [0, 0, 1, 1], [], []>} : vector<8x128xf32>, vector<128x384xf32>, vector<8x384xf32> -> vector<8x384xf32>
    %50 = vector.broadcast %8 : vector<1x384xf32> to vector<8x384xf32>
    %51 = arith.addf %49, %50 : vector<8x384xf32>
    %52 = vector.extract_strided_slice %48 {offsets = [0, 0], sizes = [8, 128], strides = [1, 1]} : vector<8x384xf32> to vector<8x128xf32>
    %53 = vector.extract_strided_slice %51 {offsets = [0, 0], sizes = [8, 128], strides = [1, 1]} : vector<8x384xf32> to vector<8x128xf32>
    %54 = arith.addf %52, %53 : vector<8x128xf32>
    %55 = arith.negf %54 : vector<8x128xf32>
    %56 = math.exp %55 : vector<8x128xf32>
    %cst_22 = arith.constant 1.000000e+00 : f32
    %57 = vector.broadcast %cst_22 : f32 to vector<8x128xf32>
    %58 = arith.addf %57, %56 : vector<8x128xf32>
    %59 = arith.divf %57, %58 : vector<8x128xf32>
    %60 = vector.extract_strided_slice %48 {offsets = [0, 128], sizes = [8, 128], strides = [1, 1]} : vector<8x384xf32> to vector<8x128xf32>
    %61 = vector.extract_strided_slice %51 {offsets = [0, 128], sizes = [8, 128], strides = [1, 1]} : vector<8x384xf32> to vector<8x128xf32>
    %62 = arith.addf %60, %61 : vector<8x128xf32>
    %63 = arith.negf %62 : vector<8x128xf32>
    %64 = math.exp %63 : vector<8x128xf32>
    %cst_23 = arith.constant 1.000000e+00 : f32
    %65 = vector.broadcast %cst_23 : f32 to vector<8x128xf32>
    %66 = arith.addf %65, %64 : vector<8x128xf32>
    %67 = arith.divf %65, %66 : vector<8x128xf32>
    %68 = vector.extract_strided_slice %48 {offsets = [0, 256], sizes = [8, 128], strides = [1, 1]} : vector<8x384xf32> to vector<8x128xf32>
    %69 = vector.extract_strided_slice %51 {offsets = [0, 256], sizes = [8, 128], strides = [1, 1]} : vector<8x384xf32> to vector<8x128xf32>
    %70 = arith.mulf %59, %69 : vector<8x128xf32>
    %71 = arith.addf %68, %70 : vector<8x128xf32>
    %72 = math.tanh %71 : vector<8x128xf32>
    %cst_24 = arith.constant 1.000000e+00 : f32
    %73 = vector.broadcast %cst_24 : f32 to vector<8x128xf32>
    %74 = arith.subf %73, %67 : vector<8x128xf32>
    %75 = arith.mulf %74, %72 : vector<8x128xf32>
    %76 = arith.mulf %67, %42 : vector<8x128xf32>
    %77 = arith.addf %75, %76 : vector<8x128xf32>
    %78 = arith.index_cast %46 : i32 to index
    %c0_25 = arith.constant 0 : index
    %79 = vector.load %arg6[%78, %c0_25] : memref<64x128xf32, #tpu.memory_space<vmem>>, vector<8x128xf32>
    tpu.vector_store %arg6[%78, %c0_25], %77 {strides = array<i32>} : memref<64x128xf32, #tpu.memory_space<vmem>>, vector<8x128xf32>,
    %c2_i32 = arith.constant 2 : i32
    %c8_i32_26 = arith.constant 8 : i32
    %80 = arith.muli %c2_i32, %c8_i32_26 : i32
    %81 = tpu.assume_multiple %80, 8 : i32
    %82 = arith.index_cast %81 : i32 to index
    %c0_27 = arith.constant 0 : index
    %83 = vector.load %arg7[%82, %c0_27] : memref<64x384xf32, #tpu.memory_space<vmem>>, vector<8x384xf32>
    %cst_28 = arith.constant dense<0.000000e+00> : vector<8x384xf32>
    %84 = tpu.matmul %77, %7, %cst_28 {dimension_numbers = #tpu.dot_dimension_numbers<[1], [0], [0], [1], [0, 0, 1, 1], [], []>} : vector<8x128xf32>, vector<128x384xf32>, vector<8x384xf32> -> vector<8x384xf32>
    %85 = vector.broadcast %8 : vector<1x384xf32> to vector<8x384xf32>
    %86 = arith.addf %84, %85 : vector<8x384xf32>
    %87 = vector.extract_strided_slice %83 {offsets = [0, 0], sizes = [8, 128], strides = [1, 1]} : vector<8x384xf32> to vector<8x128xf32>
    %88 = vector.extract_strided_slice %86 {offsets = [0, 0], sizes = [8, 128], strides = [1, 1]} : vector<8x384xf32> to vector<8x128xf32>
    %89 = arith.addf %87, %88 : vector<8x128xf32>
    %90 = arith.negf %89 : vector<8x128xf32>
    %91 = math.exp %90 : vector<8x128xf32>
    %cst_29 = arith.constant 1.000000e+00 : f32
    %92 = vector.broadcast %cst_29 : f32 to vector<8x128xf32>
    %93 = arith.addf %92, %91 : vector<8x128xf32>
    %94 = arith.divf %92, %93 : vector<8x128xf32>
    %95 = vector.extract_strided_slice %83 {offsets = [0, 128], sizes = [8, 128], strides = [1, 1]} : vector<8x384xf32> to vector<8x128xf32>
    %96 = vector.extract_strided_slice %86 {offsets = [0, 128], sizes = [8, 128], strides = [1, 1]} : vector<8x384xf32> to vector<8x128xf32>
    %97 = arith.addf %95, %96 : vector<8x128xf32>
    %98 = arith.negf %97 : vector<8x128xf32>
    %99 = math.exp %98 : vector<8x128xf32>
    %cst_30 = arith.constant 1.000000e+00 : f32
    %100 = vector.broadcast %cst_30 : f32 to vector<8x128xf32>
    %101 = arith.addf %100, %99 : vector<8x128xf32>
    %102 = arith.divf %100, %101 : vector<8x128xf32>
    %103 = vector.extract_strided_slice %83 {offsets = [0, 256], sizes = [8, 128], strides = [1, 1]} : vector<8x384xf32> to vector<8x128xf32>
    %104 = vector.extract_strided_slice %86 {offsets = [0, 256], sizes = [8, 128], strides = [1, 1]} : vector<8x384xf32> to vector<8x128xf32>
    %105 = arith.mulf %94, %104 : vector<8x128xf32>
    %106 = arith.addf %103, %105 : vector<8x128xf32>
    %107 = math.tanh %106 : vector<8x128xf32>
    %cst_31 = arith.constant 1.000000e+00 : f32
    %108 = vector.broadcast %cst_31 : f32 to vector<8x128xf32>
    %109 = arith.subf %108, %102 : vector<8x128xf32>
    %110 = arith.mulf %109, %107 : vector<8x128xf32>
    %111 = arith.mulf %102, %77 : vector<8x128xf32>
    %112 = arith.addf %110, %111 : vector<8x128xf32>
    %113 = arith.index_cast %81 : i32 to index
    %c0_32 = arith.constant 0 : index
    %114 = vector.load %arg6[%113, %c0_32] : memref<64x128xf32, #tpu.memory_space<vmem>>, vector<8x128xf32>
    tpu.vector_store %arg6[%113, %c0_32], %112 {strides = array<i32>} : memref<64x128xf32, #tpu.memory_space<vmem>>, vector<8x128xf32>,
    %c3_i32 = arith.constant 3 : i32
    %c8_i32_33 = arith.constant 8 : i32
    %115 = arith.muli %c3_i32, %c8_i32_33 : i32
    %116 = tpu.assume_multiple %115, 8 : i32
    %117 = arith.index_cast %116 : i32 to index
    %c0_34 = arith.constant 0 : index
    %118 = vector.load %arg7[%117, %c0_34] : memref<64x384xf32, #tpu.memory_space<vmem>>, vector<8x384xf32>
    %cst_35 = arith.constant dense<0.000000e+00> : vector<8x384xf32>
    %119 = tpu.matmul %112, %7, %cst_35 {dimension_numbers = #tpu.dot_dimension_numbers<[1], [0], [0], [1], [0, 0, 1, 1], [], []>} : vector<8x128xf32>, vector<128x384xf32>, vector<8x384xf32> -> vector<8x384xf32>
    %120 = vector.broadcast %8 : vector<1x384xf32> to vector<8x384xf32>
    %121 = arith.addf %119, %120 : vector<8x384xf32>
    %122 = vector.extract_strided_slice %118 {offsets = [0, 0], sizes = [8, 128], strides = [1, 1]} : vector<8x384xf32> to vector<8x128xf32>
    %123 = vector.extract_strided_slice %121 {offsets = [0, 0], sizes = [8, 128], strides = [1, 1]} : vector<8x384xf32> to vector<8x128xf32>
    %124 = arith.addf %122, %123 : vector<8x128xf32>
    %125 = arith.negf %124 : vector<8x128xf32>
    %126 = math.exp %125 : vector<8x128xf32>
    %cst_36 = arith.constant 1.000000e+00 : f32
    %127 = vector.broadcast %cst_36 : f32 to vector<8x128xf32>
    %128 = arith.addf %127, %126 : vector<8x128xf32>
    %129 = arith.divf %127, %128 : vector<8x128xf32>
    %130 = vector.extract_strided_slice %118 {offsets = [0, 128], sizes = [8, 128], strides = [1, 1]} : vector<8x384xf32> to vector<8x128xf32>
    %131 = vector.extract_strided_slice %121 {offsets = [0, 128], sizes = [8, 128], strides = [1, 1]} : vector<8x384xf32> to vector<8x128xf32>
    %132 = arith.addf %130, %131 : vector<8x128xf32>
    %133 = arith.negf %132 : vector<8x128xf32>
    %134 = math.exp %133 : vector<8x128xf32>
    %cst_37 = arith.constant 1.000000e+00 : f32
    %135 = vector.broadcast %cst_37 : f32 to vector<8x128xf32>
    %136 = arith.addf %135, %134 : vector<8x128xf32>
    %137 = arith.divf %135, %136 : vector<8x128xf32>
    %138 = vector.extract_strided_slice %118 {offsets = [0, 256], sizes = [8, 128], strides = [1, 1]} : vector<8x384xf32> to vector<8x128xf32>
    %139 = vector.extract_strided_slice %121 {offsets = [0, 256], sizes = [8, 128], strides = [1, 1]} : vector<8x384xf32> to vector<8x128xf32>
    %140 = arith.mulf %129, %139 : vector<8x128xf32>
    %141 = arith.addf %138, %140 : vector<8x128xf32>
    %142 = math.tanh %141 : vector<8x128xf32>
    %cst_38 = arith.constant 1.000000e+00 : f32
    %143 = vector.broadcast %cst_38 : f32 to vector<8x128xf32>
    %144 = arith.subf %143, %137 : vector<8x128xf32>
    %145 = arith.mulf %144, %142 : vector<8x128xf32>
    %146 = arith.mulf %137, %112 : vector<8x128xf32>
    %147 = arith.addf %145, %146 : vector<8x128xf32>
    %148 = arith.index_cast %116 : i32 to index
    %c0_39 = arith.constant 0 : index
    %149 = vector.load %arg6[%148, %c0_39] : memref<64x128xf32, #tpu.memory_space<vmem>>, vector<8x128xf32>
    tpu.vector_store %arg6[%148, %c0_39], %147 {strides = array<i32>} : memref<64x128xf32, #tpu.memory_space<vmem>>, vector<8x128xf32>,
    %c4_i32 = arith.constant 4 : i32
    %c8_i32_40 = arith.constant 8 : i32
    %150 = arith.muli %c4_i32, %c8_i32_40 : i32
    %151 = tpu.assume_multiple %150, 8 : i32
    %152 = arith.index_cast %151 : i32 to index
    %c0_41 = arith.constant 0 : index
    %153 = vector.load %arg7[%152, %c0_41] : memref<64x384xf32, #tpu.memory_space<vmem>>, vector<8x384xf32>
    %cst_42 = arith.constant dense<0.000000e+00> : vector<8x384xf32>
    %154 = tpu.matmul %147, %7, %cst_42 {dimension_numbers = #tpu.dot_dimension_numbers<[1], [0], [0], [1], [0, 0, 1, 1], [], []>} : vector<8x128xf32>, vector<128x384xf32>, vector<8x384xf32> -> vector<8x384xf32>
    %155 = vector.broadcast %8 : vector<1x384xf32> to vector<8x384xf32>
    %156 = arith.addf %154, %155 : vector<8x384xf32>
    %157 = vector.extract_strided_slice %153 {offsets = [0, 0], sizes = [8, 128], strides = [1, 1]} : vector<8x384xf32> to vector<8x128xf32>
    %158 = vector.extract_strided_slice %156 {offsets = [0, 0], sizes = [8, 128], strides = [1, 1]} : vector<8x384xf32> to vector<8x128xf32>
    %159 = arith.addf %157, %158 : vector<8x128xf32>
    %160 = arith.negf %159 : vector<8x128xf32>
    %161 = math.exp %160 : vector<8x128xf32>
    %cst_43 = arith.constant 1.000000e+00 : f32
    %162 = vector.broadcast %cst_43 : f32 to vector<8x128xf32>
    %163 = arith.addf %162, %161 : vector<8x128xf32>
    %164 = arith.divf %162, %163 : vector<8x128xf32>
    %165 = vector.extract_strided_slice %153 {offsets = [0, 128], sizes = [8, 128], strides = [1, 1]} : vector<8x384xf32> to vector<8x128xf32>
    %166 = vector.extract_strided_slice %156 {offsets = [0, 128], sizes = [8, 128], strides = [1, 1]} : vector<8x384xf32> to vector<8x128xf32>
    %167 = arith.addf %165, %166 : vector<8x128xf32>
    %168 = arith.negf %167 : vector<8x128xf32>
    %169 = math.exp %168 : vector<8x128xf32>
    %cst_44 = arith.constant 1.000000e+00 : f32
    %170 = vector.broadcast %cst_44 : f32 to vector<8x128xf32>
    %171 = arith.addf %170, %169 : vector<8x128xf32>
    %172 = arith.divf %170, %171 : vector<8x128xf32>
    %173 = vector.extract_strided_slice %153 {offsets = [0, 256], sizes = [8, 128], strides = [1, 1]} : vector<8x384xf32> to vector<8x128xf32>
    %174 = vector.extract_strided_slice %156 {offsets = [0, 256], sizes = [8, 128], strides = [1, 1]} : vector<8x384xf32> to vector<8x128xf32>
    %175 = arith.mulf %164, %174 : vector<8x128xf32>
    %176 = arith.addf %173, %175 : vector<8x128xf32>
    %177 = math.tanh %176 : vector<8x128xf32>
    %cst_45 = arith.constant 1.000000e+00 : f32
    %178 = vector.broadcast %cst_45 : f32 to vector<8x128xf32>
    %179 = arith.subf %178, %172 : vector<8x128xf32>
    %180 = arith.mulf %179, %177 : vector<8x128xf32>
    %181 = arith.mulf %172, %147 : vector<8x128xf32>
    %182 = arith.addf %180, %181 : vector<8x128xf32>
    %183 = arith.index_cast %151 : i32 to index
    %c0_46 = arith.constant 0 : index
    %184 = vector.load %arg6[%183, %c0_46] : memref<64x128xf32, #tpu.memory_space<vmem>>, vector<8x128xf32>
    tpu.vector_store %arg6[%183, %c0_46], %182 {strides = array<i32>} : memref<64x128xf32, #tpu.memory_space<vmem>>, vector<8x128xf32>,
    %c5_i32 = arith.constant 5 : i32
    %c8_i32_47 = arith.constant 8 : i32
    %185 = arith.muli %c5_i32, %c8_i32_47 : i32
    %186 = tpu.assume_multiple %185, 8 : i32
    %187 = arith.index_cast %186 : i32 to index
    %c0_48 = arith.constant 0 : index
    %188 = vector.load %arg7[%187, %c0_48] : memref<64x384xf32, #tpu.memory_space<vmem>>, vector<8x384xf32>
    %cst_49 = arith.constant dense<0.000000e+00> : vector<8x384xf32>
    %189 = tpu.matmul %182, %7, %cst_49 {dimension_numbers = #tpu.dot_dimension_numbers<[1], [0], [0], [1], [0, 0, 1, 1], [], []>} : vector<8x128xf32>, vector<128x384xf32>, vector<8x384xf32> -> vector<8x384xf32>
    %190 = vector.broadcast %8 : vector<1x384xf32> to vector<8x384xf32>
    %191 = arith.addf %189, %190 : vector<8x384xf32>
    %192 = vector.extract_strided_slice %188 {offsets = [0, 0], sizes = [8, 128], strides = [1, 1]} : vector<8x384xf32> to vector<8x128xf32>
    %193 = vector.extract_strided_slice %191 {offsets = [0, 0], sizes = [8, 128], strides = [1, 1]} : vector<8x384xf32> to vector<8x128xf32>
    %194 = arith.addf %192, %193 : vector<8x128xf32>
    %195 = arith.negf %194 : vector<8x128xf32>
    %196 = math.exp %195 : vector<8x128xf32>
    %cst_50 = arith.constant 1.000000e+00 : f32
    %197 = vector.broadcast %cst_50 : f32 to vector<8x128xf32>
    %198 = arith.addf %197, %196 : vector<8x128xf32>
    %199 = arith.divf %197, %198 : vector<8x128xf32>
    %200 = vector.extract_strided_slice %188 {offsets = [0, 128], sizes = [8, 128], strides = [1, 1]} : vector<8x384xf32> to vector<8x128xf32>
    %201 = vector.extract_strided_slice %191 {offsets = [0, 128], sizes = [8, 128], strides = [1, 1]} : vector<8x384xf32> to vector<8x128xf32>
    %202 = arith.addf %200, %201 : vector<8x128xf32>
    %203 = arith.negf %202 : vector<8x128xf32>
    %204 = math.exp %203 : vector<8x128xf32>
    %cst_51 = arith.constant 1.000000e+00 : f32
    %205 = vector.broadcast %cst_51 : f32 to vector<8x128xf32>
    %206 = arith.addf %205, %204 : vector<8x128xf32>
    %207 = arith.divf %205, %206 : vector<8x128xf32>
    %208 = vector.extract_strided_slice %188 {offsets = [0, 256], sizes = [8, 128], strides = [1, 1]} : vector<8x384xf32> to vector<8x128xf32>
    %209 = vector.extract_strided_slice %191 {offsets = [0, 256], sizes = [8, 128], strides = [1, 1]} : vector<8x384xf32> to vector<8x128xf32>
    %210 = arith.mulf %199, %209 : vector<8x128xf32>
    %211 = arith.addf %208, %210 : vector<8x128xf32>
    %212 = math.tanh %211 : vector<8x128xf32>
    %cst_52 = arith.constant 1.000000e+00 : f32
    %213 = vector.broadcast %cst_52 : f32 to vector<8x128xf32>
    %214 = arith.subf %213, %207 : vector<8x128xf32>
    %215 = arith.mulf %214, %212 : vector<8x128xf32>
    %216 = arith.mulf %207, %182 : vector<8x128xf32>
    %217 = arith.addf %215, %216 : vector<8x128xf32>
    %218 = arith.index_cast %186 : i32 to index
    %c0_53 = arith.constant 0 : index
    %219 = vector.load %arg6[%218, %c0_53] : memref<64x128xf32, #tpu.memory_space<vmem>>, vector<8x128xf32>
    tpu.vector_store %arg6[%218, %c0_53], %217 {strides = array<i32>} : memref<64x128xf32, #tpu.memory_space<vmem>>, vector<8x128xf32>,
    %c6_i32 = arith.constant 6 : i32
    %c8_i32_54 = arith.constant 8 : i32
    %220 = arith.muli %c6_i32, %c8_i32_54 : i32
    %221 = tpu.assume_multiple %220, 8 : i32
    %222 = arith.index_cast %221 : i32 to index
    %c0_55 = arith.constant 0 : index
    %223 = vector.load %arg7[%222, %c0_55] : memref<64x384xf32, #tpu.memory_space<vmem>>, vector<8x384xf32>
    %cst_56 = arith.constant dense<0.000000e+00> : vector<8x384xf32>
    %224 = tpu.matmul %217, %7, %cst_56 {dimension_numbers = #tpu.dot_dimension_numbers<[1], [0], [0], [1], [0, 0, 1, 1], [], []>} : vector<8x128xf32>, vector<128x384xf32>, vector<8x384xf32> -> vector<8x384xf32>
    %225 = vector.broadcast %8 : vector<1x384xf32> to vector<8x384xf32>
    %226 = arith.addf %224, %225 : vector<8x384xf32>
    %227 = vector.extract_strided_slice %223 {offsets = [0, 0], sizes = [8, 128], strides = [1, 1]} : vector<8x384xf32> to vector<8x128xf32>
    %228 = vector.extract_strided_slice %226 {offsets = [0, 0], sizes = [8, 128], strides = [1, 1]} : vector<8x384xf32> to vector<8x128xf32>
    %229 = arith.addf %227, %228 : vector<8x128xf32>
    %230 = arith.negf %229 : vector<8x128xf32>
    %231 = math.exp %230 : vector<8x128xf32>
    %cst_57 = arith.constant 1.000000e+00 : f32
    %232 = vector.broadcast %cst_57 : f32 to vector<8x128xf32>
    %233 = arith.addf %232, %231 : vector<8x128xf32>
    %234 = arith.divf %232, %233 : vector<8x128xf32>
    %235 = vector.extract_strided_slice %223 {offsets = [0, 128], sizes = [8, 128], strides = [1, 1]} : vector<8x384xf32> to vector<8x128xf32>
    %236 = vector.extract_strided_slice %226 {offsets = [0, 128], sizes = [8, 128], strides = [1, 1]} : vector<8x384xf32> to vector<8x128xf32>
    %237 = arith.addf %235, %236 : vector<8x128xf32>
    %238 = arith.negf %237 : vector<8x128xf32>
    %239 = math.exp %238 : vector<8x128xf32>
    %cst_58 = arith.constant 1.000000e+00 : f32
    %240 = vector.broadcast %cst_58 : f32 to vector<8x128xf32>
    %241 = arith.addf %240, %239 : vector<8x128xf32>
    %242 = arith.divf %240, %241 : vector<8x128xf32>
    %243 = vector.extract_strided_slice %223 {offsets = [0, 256], sizes = [8, 128], strides = [1, 1]} : vector<8x384xf32> to vector<8x128xf32>
    %244 = vector.extract_strided_slice %226 {offsets = [0, 256], sizes = [8, 128], strides = [1, 1]} : vector<8x384xf32> to vector<8x128xf32>
    %245 = arith.mulf %234, %244 : vector<8x128xf32>
    %246 = arith.addf %243, %245 : vector<8x128xf32>
    %247 = math.tanh %246 : vector<8x128xf32>
    %cst_59 = arith.constant 1.000000e+00 : f32
    %248 = vector.broadcast %cst_59 : f32 to vector<8x128xf32>
    %249 = arith.subf %248, %242 : vector<8x128xf32>
    %250 = arith.mulf %249, %247 : vector<8x128xf32>
    %251 = arith.mulf %242, %217 : vector<8x128xf32>
    %252 = arith.addf %250, %251 : vector<8x128xf32>
    %253 = arith.index_cast %221 : i32 to index
    %c0_60 = arith.constant 0 : index
    %254 = vector.load %arg6[%253, %c0_60] : memref<64x128xf32, #tpu.memory_space<vmem>>, vector<8x128xf32>
    tpu.vector_store %arg6[%253, %c0_60], %252 {strides = array<i32>} : memref<64x128xf32, #tpu.memory_space<vmem>>, vector<8x128xf32>,
    %c7_i32 = arith.constant 7 : i32
    %c8_i32_61 = arith.constant 8 : i32
    %255 = arith.muli %c7_i32, %c8_i32_61 : i32
    %256 = tpu.assume_multiple %255, 8 : i32
    %257 = arith.index_cast %256 : i32 to index
    %c0_62 = arith.constant 0 : index
    %258 = vector.load %arg7[%257, %c0_62] : memref<64x384xf32, #tpu.memory_space<vmem>>, vector<8x384xf32>
    %cst_63 = arith.constant dense<0.000000e+00> : vector<8x384xf32>
    %259 = tpu.matmul %252, %7, %cst_63 {dimension_numbers = #tpu.dot_dimension_numbers<[1], [0], [0], [1], [0, 0, 1, 1], [], []>} : vector<8x128xf32>, vector<128x384xf32>, vector<8x384xf32> -> vector<8x384xf32>
    %260 = vector.broadcast %8 : vector<1x384xf32> to vector<8x384xf32>
    %261 = arith.addf %259, %260 : vector<8x384xf32>
    %262 = vector.extract_strided_slice %258 {offsets = [0, 0], sizes = [8, 128], strides = [1, 1]} : vector<8x384xf32> to vector<8x128xf32>
    %263 = vector.extract_strided_slice %261 {offsets = [0, 0], sizes = [8, 128], strides = [1, 1]} : vector<8x384xf32> to vector<8x128xf32>
    %264 = arith.addf %262, %263 : vector<8x128xf32>
    %265 = arith.negf %264 : vector<8x128xf32>
    %266 = math.exp %265 : vector<8x128xf32>
    %cst_64 = arith.constant 1.000000e+00 : f32
    %267 = vector.broadcast %cst_64 : f32 to vector<8x128xf32>
    %268 = arith.addf %267, %266 : vector<8x128xf32>
    %269 = arith.divf %267, %268 : vector<8x128xf32>
    %270 = vector.extract_strided_slice %258 {offsets = [0, 128], sizes = [8, 128], strides = [1, 1]} : vector<8x384xf32> to vector<8x128xf32>
    %271 = vector.extract_strided_slice %261 {offsets = [0, 128], sizes = [8, 128], strides = [1, 1]} : vector<8x384xf32> to vector<8x128xf32>
    %272 = arith.addf %270, %271 : vector<8x128xf32>
    %273 = arith.negf %272 : vector<8x128xf32>
    %274 = math.exp %273 : vector<8x128xf32>
    %cst_65 = arith.constant 1.000000e+00 : f32
    %275 = vector.broadcast %cst_65 : f32 to vector<8x128xf32>
    %276 = arith.addf %275, %274 : vector<8x128xf32>
    %277 = arith.divf %275, %276 : vector<8x128xf32>
    %278 = vector.extract_strided_slice %258 {offsets = [0, 256], sizes = [8, 128], strides = [1, 1]} : vector<8x384xf32> to vector<8x128xf32>
    %279 = vector.extract_strided_slice %261 {offsets = [0, 256], sizes = [8, 128], strides = [1, 1]} : vector<8x384xf32> to vector<8x128xf32>
    %280 = arith.mulf %269, %279 : vector<8x128xf32>
    %281 = arith.addf %278, %280 : vector<8x128xf32>
    %282 = math.tanh %281 : vector<8x128xf32>
    %cst_66 = arith.constant 1.000000e+00 : f32
    %283 = vector.broadcast %cst_66 : f32 to vector<8x128xf32>
    %284 = arith.subf %283, %277 : vector<8x128xf32>
    %285 = arith.mulf %284, %282 : vector<8x128xf32>
    %286 = arith.mulf %277, %252 : vector<8x128xf32>
    %287 = arith.addf %285, %286 : vector<8x128xf32>
    %288 = arith.index_cast %256 : i32 to index
    %c0_67 = arith.constant 0 : index
    %289 = vector.load %arg6[%288, %c0_67] : memref<64x128xf32, #tpu.memory_space<vmem>>, vector<8x128xf32>
    tpu.vector_store %arg6[%288, %c0_67], %287 {strides = array<i32>} : memref<64x128xf32, #tpu.memory_space<vmem>>, vector<8x128xf32>,
    %c8_i32_68 = arith.constant 8 : i32
    return
  }
}

</mosaic_0001>

<llo_original>
// kernel: tpu_custom_call.1
$region0: #{tpu_custom_call.1}
  #allocation0 [shape = 'u32[]', space=smem, size = 0x4, offset = 0x4, fixed_abs, tag = 'smem constant byte address 0x4 - core index']
  #allocation1 [shape = 'u32[144,128]{1,0:T(1,128)}', space=vmem, size = 0x12000, scoped, tag = 'internal scratch']
  #allocation2 [shape = 'f32[64,384]{1,0:T(8,128)}', space=vmem, size = 0x18000, scoped, tag = 'scratch operand']
  %s0 = inlined_call_operand.hbm [shape: f32[64,128], index: 0, kind: input, shape index: {}]
  %s1 = inlined_call_operand.hbm [shape: f32[8,128], index: 1, kind: input, shape index: {}]
  %s2 = inlined_call_operand.hbm [shape: f32[128,384], index: 2, kind: input, shape index: {}]
  %s3 = inlined_call_operand.hbm [shape: f32[128,384], index: 3, kind: input, shape index: {}]
  %s4 = inlined_call_operand.vmem [shape: f32[1,384], index: 4, kind: input, shape index: {}]
  %s5 = inlined_call_operand.vmem [shape: f32[1,384], index: 5, kind: input, shape index: {}]
  %s6 = inlined_call_operand.hbm [shape: f32[64,128], index: 6, kind: output, shape index: {}]
  %s7 = sld [smem:[#allocation0]]
  $region50: #{tpu_custom_call.1} parent=0
    _
  %s9 = ssub.s32 1, %s7
  %s10 = scalar_select 0, %s9, %s7
  $region1: #{tpu_custom_call.1} parent=0
    #allocation3 [shape = 'u8[32768]{0}', space=vmem, size = 0x8000, scoped, tag = 'input window, operand 0, single buffered']
    #allocation4 [shape = 's32[1]{0}', space=sflag, size = 0x4, scoped, tag = 'scoped memory for tpu_custom_call.1']
    #allocation5 [shape = 's32[1]{0}', space=sflag, size = 0x4, scoped, tag = 'scoped memory for tpu_custom_call.1']
    #allocation6 [shape = 'u8[4096]{0}', space=vmem, size = 0x1000, scoped, tag = 'input window, operand 1, single buffered']
    #allocation7 [shape = 's32[1]{0}', space=sflag, size = 0x4, scoped, tag = 'scoped memory for tpu_custom_call.1']
    #allocation8 [shape = 'u8[196608]{0}', space=vmem, size = 0x30000, scoped, tag = 'input window, operand 2, single buffered']
    #allocation9 [shape = 'u8[196608]{0}', space=vmem, size = 0x30000, scoped, tag = 'input window, operand 3, single buffered']
    #allocation10 [shape = 's32[1]{0}', space=sflag, size = 0x4, scoped, tag = 'scoped memory for tpu_custom_call.1']
    #allocation11 [shape = 'u8[32768]{0}', space=vmem, size = 0x8000, scoped, tag = 'output window, operand 0, single buffered']
    %11 = vsyncpa [#allocation4], 0
    %12 = vsyncpa [#allocation7], 0
    %13 = vsyncpa [#allocation10], 0
    %14 = vsyncpa [#allocation5], 0
    // Predicated region
    $region2: #{tpu_custom_call.1} parent=1 // pred_check
      _
    $region3: #{tpu_custom_call.1} parent=1 // pred_check_branch
      %16 = sbr.rel (0) target = $region5
    $region4: #{tpu_custom_call.1} parent=1 // pred_region
      %s18 = ssub.s32 1024, 1024
      %19 = vsyncadd [#allocation4], %s18
      %s20 = sshll.u32 [#allocation3], 4
      %s21 = int_to_ptr.vmem [resolvable:$true] %s20
      %26 = dma.hbm_to_vmem [thread:$0]  %s0, 1024, %s21, [#allocation4], 128, 128, 8
    $region5: #{tpu_custom_call.1} parent=1 // pred_fallthru
      _
    // Predicated region
    $region6: #{tpu_custom_call.1} parent=1 // pred_check
      _
    $region7: #{tpu_custom_call.1} parent=1 // pred_check_branch
      %28 = sbr.rel (0) target = $region9
    $region8: #{tpu_custom_call.1} parent=1 // pred_region
      %s30 = ssub.s32 128, 128
      %31 = vsyncadd [#allocation7], %s30
      %s33 = sshll.u32 [#allocation6], 4
      %s34 = int_to_ptr.vmem [resolvable:$true] %s33
      %36 = dma.hbm_to_vmem [thread:$0]  %s1, 128, %s34, [#allocation7]
    $region9: #{tpu_custom_call.1} parent=1 // pred_fallthru
      _
    // Predicated region
    $region10: #{tpu_custom_call.1} parent=1 // pred_check
      _
    $region11: #{tpu_custom_call.1} parent=1 // pred_check_branch
      %38 = sbr.rel (0) target = $region13
    $region12: #{tpu_custom_call.1} parent=1 // pred_region
      %s40 = ssub.s32 6144, 6144
      %41 = vsyncadd [#allocation7], %s40
      %s42 = sshll.u32 [#allocation8], 4
      %s43 = int_to_ptr.vmem [resolvable:$true] %s42
      %48 = dma.hbm_to_vmem [thread:$0]  %s2, 6144, %s43, [#allocation7], 384, 384, 24
    $region13: #{tpu_custom_call.1} parent=1 // pred_fallthru
      _
    // Predicated region
    $region14: #{tpu_custom_call.1} parent=1 // pred_check
      _
    $region15: #{tpu_custom_call.1} parent=1 // pred_check_branch
      %50 = sbr.rel (0) target = $region17
    $region16: #{tpu_custom_call.1} parent=1 // pred_region
      %s52 = ssub.s32 6144, 6144
      %53 = vsyncadd [#allocation10], %s52
      %s54 = sshll.u32 [#allocation9], 4
      %s55 = int_to_ptr.vmem [resolvable:$true] %s54
      %60 = dma.hbm_to_vmem [thread:$0]  %s3, 6144, %s55, [#allocation10], 384, 384, 24
    $region17: #{tpu_custom_call.1} parent=1 // pred_fallthru
      _
    // Predicated region
    $region18: #{tpu_custom_call.1} parent=1 // pred_check
      _
    $region19: #{tpu_custom_call.1} parent=1 // pred_check_branch
      %62 = sbr.rel (0) target = $region21
    $region20: #{tpu_custom_call.1} parent=1 // pred_region
      _
    $region21: #{tpu_custom_call.1} parent=1 // pred_fallthru
      _
    // Predicated region
    $region22: #{tpu_custom_call.1} parent=1 // pred_check
      _
    $region23: #{tpu_custom_call.1} parent=1 // pred_check_branch
      %64 = sbr.rel (0) target = $region25
    $region24: #{tpu_custom_call.1} parent=1 // pred_region
      _
    $region25: #{tpu_custom_call.1} parent=1 // pred_fallthru
      _
    // Predicated region
    $region26: #{tpu_custom_call.1} parent=1 // pred_check
      _
    $region27: #{tpu_custom_call.1} parent=1 // pred_check_branch
      %66 = sbr.rel (0) target = $region29
    $region28: #{tpu_custom_call.1} parent=1 // pred_region
      %67 = dma.done [#allocation4], 1024
    $region29: #{tpu_custom_call.1} parent=1 // pred_fallthru
      _
    // Predicated region
    $region30: #{tpu_custom_call.1} parent=1 // pred_check
      _
    $region31: #{tpu_custom_call.1} parent=1 // pred_check_branch
      %69 = sbr.rel (0) target = $region33
    $region32: #{tpu_custom_call.1} parent=1 // pred_region
      %70 = dma.done [#allocation7], 128
    $region33: #{tpu_custom_call.1} parent=1 // pred_fallthru
      _
    // Predicated region
    $region34: #{tpu_custom_call.1} parent=1 // pred_check
      _
    $region35: #{tpu_custom_call.1} parent=1 // pred_check_branch
      %72 = sbr.rel (0) target = $region37
    $region36: #{tpu_custom_call.1} parent=1 // pred_region
      %73 = dma.done [#allocation7], 6144
    $region37: #{tpu_custom_call.1} parent=1 // pred_fallthru
      _
    // Predicated region
    $region38: #{tpu_custom_call.1} parent=1 // pred_check
      _
    $region39: #{tpu_custom_call.1} parent=1 // pred_check_branch
      %75 = sbr.rel (0) target = $region41
    $region40: #{tpu_custom_call.1} parent=1 // pred_region
      %76 = dma.done [#allocation10], 6144
    $region41: #{tpu_custom_call.1} parent=1 // pred_fallthru
      _
    %v77 = vld [vmem:[#allocation3] sm:$0xff]
    %v78 = vld [vmem:[#allocation3 + $0x8] sm:$0xff]
    %v79 = vld [vmem:[#allocation3 + $0x10] sm:$0xff]
    %v80 = vld [vmem:[#allocation3 + $0x18] sm:$0xff]
    %v81 = vld [vmem:[#allocation3 + $0x20] sm:$0xff]
    %v82 = vld [vmem:[#allocation3 + $0x28] sm:$0xff]
    %v83 = vld [vmem:[#allocation3 + $0x30] sm:$0xff]
    %v84 = vld [vmem:[#allocation3 + $0x38] sm:$0xff]
    %v85 = vld [vmem:[#allocation8] sm:$0xff]
    %v86 = vld [vmem:[#allocation8 + $0x8] sm:$0xff]
    %v87 = vld [vmem:[#allocation8 + $0x10] sm:$0xff]
    %v88 = vld [vmem:[#allocation8 + $0x18] sm:$0xff]
    %v89 = vld [vmem:[#allocation8 + $0x20] sm:$0xff]
    %v90 = vld [vmem:[#allocation8 + $0x28] sm:$0xff]
    %v91 = vld [vmem:[#allocation8 + $0x30] sm:$0xff]
    %v92 = vld [vmem:[#allocation8 + $0x38] sm:$0xff]
    %v93 = vld [vmem:[#allocation8 + $0x40] sm:$0xff]
    %v94 = vld [vmem:[#allocation8 + $0x48] sm:$0xff]
    %v95 = vld [vmem:[#allocation8 + $0x50] sm:$0xff]
    %v96 = vld [vmem:[#allocation8 + $0x58] sm:$0xff]
    %v97 = vld [vmem:[#allocation8 + $0x60] sm:$0xff]
    %v98 = vld [vmem:[#allocation8 + $0x68] sm:$0xff]
    %v99 = vld [vmem:[#allocation8 + $0x70] sm:$0xff]
    %v100 = vld [vmem:[#allocation8 + $0x78] sm:$0xff]
    %v101 = vld [vmem:[#allocation8 + $0x80] sm:$0xff]
    %v102 = vld [vmem:[#allocation8 + $0x88] sm:$0xff]
    %v103 = vld [vmem:[#allocation8 + $0x90] sm:$0xff]
    %v104 = vld [vmem:[#allocation8 + $0x98] sm:$0xff]
    %v105 = vld [vmem:[#allocation8 + $0xa0] sm:$0xff]
    %v106 = vld [vmem:[#allocation8 + $0xa8] sm:$0xff]
    %v107 = vld [vmem:[#allocation8 + $0xb0] sm:$0xff]
    %v108 = vld [vmem:[#allocation8 + $0xb8] sm:$0xff]
    %v109 = vld [vmem:[#allocation8 + $0xc0] sm:$0xff]
    %v110 = vld [vmem:[#allocation8 + $0xc8] sm:$0xff]
    %v111 = vld [vmem:[#allocation8 + $0xd0] sm:$0xff]
    %v112 = vld [vmem:[#allocation8 + $0xd8] sm:$0xff]
    %v113 = vld [vmem:[#allocation8 + $0xe0] sm:$0xff]
    %v114 = vld [vmem:[#allocation8 + $0xe8] sm:$0xff]
    %v115 = vld [vmem:[#allocation8 + $0xf0] sm:$0xff]
    %v116 = vld [vmem:[#allocation8 + $0xf8] sm:$0xff]
    %v117 = vld [vmem:[#allocation8 + $0x100] sm:$0xff]
    %v118 = vld [vmem:[#allocation8 + $0x108] sm:$0xff]
    %v119 = vld [vmem:[#allocation8 + $0x110] sm:$0xff]
    %v120 = vld [vmem:[#allocation8 + $0x118] sm:$0xff]
    %v121 = vld [vmem:[#allocation8 + $0x120] sm:$0xff]
    %v122 = vld [vmem:[#allocation8 + $0x128] sm:$0xff]
    %v123 = vld [vmem:[#allocation8 + $0x130] sm:$0xff]
    %v124 = vld [vmem:[#allocation8 + $0x138] sm:$0xff]
    %v125 = vld [vmem:[#allocation8 + $0x140] sm:$0xff]
    %v126 = vld [vmem:[#allocation8 + $0x148] sm:$0xff]
    %v127 = vld [vmem:[#allocation8 + $0x150] sm:$0xff]
    %v128 = vld [vmem:[#allocation8 + $0x158] sm:$0xff]
    %v129 = vld [vmem:[#allocation8 + $0x160] sm:$0xff]
    %v130 = vld [vmem:[#allocation8 + $0x168] sm:$0xff]
    %v131 = vld [vmem:[#allocation8 + $0x170] sm:$0xff]
    %v132 = vld [vmem:[#allocation8 + $0x178] sm:$0xff]
    %v133 = vld [vmem:[%s4] sm:$0x7]
    %v135 = vlaneseq
    %v136 = vshrl.u32 %v135, 7
    %v137 = vsub.s32 0, %v136
    %v138 = vrot.slane %v133, %v137
    %v139 = vlaneseq
    %v140 = vshrl.u32 %v139, 7
    %v141 = vsub.s32 1, %v140
    %v142 = vrot.slane %v133, %v141
    %v143 = vlaneseq
    %v144 = vshrl.u32 %v143, 7
    %v145 = vsub.s32 2, %v144
    %v146 = vrot.slane %v133, %v145
    %150 = vmatprep.subr.mxu0 %v86
    %151 = vmatpush1.msra.mxu0 %v85
    %152 = vmatprep.subr.mxu0 %v89
    %153 = vmatpush1.msra.mxu0 %v88
    %154 = vmatprep.subr.mxu0 %v92
    %155 = vmatpush1.msra.mxu0 %v91
    %156 = vmatprep.subr.mxu0 %v95
    %157 = vmatpush1.msra.mxu0 %v94
    %158 = vmatprep.subr.mxu0 %v98
    %159 = vmatpush1.msra.mxu0 %v97
    %160 = vmatprep.subr.mxu0 %v101
    %161 = vmatpush1.msra.mxu0 %v100
    %162 = vmatprep.subr.mxu0 %v104
    %163 = vmatpush1.msra.mxu0 %v103
    %164 = vmatprep.subr.mxu0 %v107
    %165 = vmatpush1.msra.mxu0 %v106
    %166 = vmatprep.subr.mxu0 %v110
    %167 = vmatpush1.msra.mxu0 %v109
    %168 = vmatprep.subr.mxu0 %v113
    %169 = vmatpush1.msra.mxu0 %v112
    %170 = vmatprep.subr.mxu0 %v116
    %171 = vmatpush1.msra.mxu0 %v115
    %172 = vmatprep.subr.mxu0 %v119
    %173 = vmatpush1.msra.mxu0 %v118
    %174 = vmatprep.subr.mxu0 %v122
    %175 = vmatpush1.msra.mxu0 %v121
    %176 = vmatprep.subr.mxu0 %v125
    %177 = vmatpush1.msra.mxu0 %v124
    %178 = vmatprep.subr.mxu0 %v128
    %179 = vmatpush1.msra.mxu0 %v127
    %180 = vmatprep.subr.mxu0 %v131
    %181 = vmatpush1.msra.mxu0 %v130
    %182 = vmatprep.subr.mxu0 0.0
    %183 = vmatpush1.msra.mxu0 0.0
    %184 = vmatprep.subr.mxu0 0.0
    %185 = vmatpush1.msra.mxu0 0.0
    %186 = vmatprep.subr.mxu0 0.0
    %187 = vmatpush1.msra.mxu0 0.0
    %188 = vmatprep.subr.mxu0 0.0
    %189 = vmatpush1.msra.mxu0 0.0
    %190 = vmatprep.subr.mxu0 0.0
    %191 = vmatpush1.msra.mxu0 0.0
    %192 = vmatprep.subr.mxu0 0.0
    %193 = vmatpush1.msra.mxu0 0.0
    %194 = vmatprep.subr.mxu0 0.0
    %195 = vmatpush1.msra.mxu0 0.0
    %196 = vmatprep.subr.mxu0 0.0
    %197 = vmatpush1.msra.mxu0 0.0
    %198 = vmatprep.subr.mxu0 0.0
    %199 = vmatpush1.msra.mxu0 0.0
    %200 = vmatprep.subr.mxu0 0.0
    %201 = vmatpush1.msra.mxu0 0.0
    %202 = vmatprep.subr.mxu0 0.0
    %203 = vmatpush1.msra.mxu0 0.0
    %204 = vmatprep.subr.mxu0 0.0
    %205 = vmatpush1.msra.mxu0 0.0
    %206 = vmatprep.subr.mxu0 0.0
    %207 = vmatpush1.msra.mxu0 0.0
    %208 = vmatprep.subr.mxu0 0.0
    %209 = vmatpush1.msra.mxu0 0.0
    %210 = vmatprep.subr.mxu0 0.0
    %211 = vmatpush1.msra.mxu0 0.0
    %212 = vmatprep.subr.mxu0 0.0
    %213 = vmatpush1.msra.mxu0 0.0
    %214 = vmatprep.mubr.f32.mxu0 0.0
    %215 = vmatmul.mubr.f32.gmra.mrb[0].mxu0 %v77
    %v216 = vpop.f32.mrb[0].mxu0
    %v217 = vadd.f32 %v138, %v216
    %v218 = vpop.f32.mrb[0].mxu0
    %v219 = vadd.f32 %v142, %v218
    %220 = vmatprep.mubr.f32.mxu0 0.0
    %221 = vmatmul.mubr.f32.gmra.mrb[0].mxu0 %v78
    %v222 = vpop.f32.mrb[0].mxu0
    %v223 = vadd.f32 %v138, %v222
    %v224 = vpop.f32.mrb[0].mxu0
    %v225 = vadd.f32 %v142, %v224
    %226 = vmatprep.mubr.f32.mxu0 0.0
    %227 = vmatmul.mubr.f32.gmra.mrb[0].mxu0 %v79
    %v228 = vpop.f32.mrb[0].mxu0
    %v229 = vadd.f32 %v138, %v228
    %v230 = vpop.f32.mrb[0].mxu0
    %v231 = vadd.f32 %v142, %v230
    %232 = vmatprep.mubr.f32.mxu0 0.0
    %233 = vmatmul.mubr.f32.gmra.mrb[0].mxu0 %v80
    %v234 = vpop.f32.mrb[0].mxu0
    %v235 = vadd.f32 %v138, %v234
    %v236 = vpop.f32.mrb[0].mxu0
    %v237 = vadd.f32 %v142, %v236
    %238 = vmatprep.mubr.f32.mxu0 0.0
    %239 = vmatmul.mubr.f32.gmra.mrb[0].mxu0 %v81
    %v240 = vpop.f32.mrb[0].mxu0
    %v241 = vadd.f32 %v138, %v240
    %v242 = vpop.f32.mrb[0].mxu0
    %v243 = vadd.f32 %v142, %v242
    %244 = vmatprep.mubr.f32.mxu0 0.0
    %245 = vmatmul.mubr.f32.gmra.mrb[0].mxu0 %v82
    %v246 = vpop.f32.mrb[0].mxu0
    %v247 = vadd.f32 %v138, %v246
    %v248 = vpop.f32.mrb[0].mxu0
    %v249 = vadd.f32 %v142, %v248
    %250 = vmatprep.mubr.f32.mxu0 0.0
    %251 = vmatmul.mubr.f32.gmra.mrb[0].mxu0 %v83
    %v252 = vpop.f32.mrb[0].mxu0
    %v253 = vadd.f32 %v138, %v252
    %v254 = vpop.f32.mrb[0].mxu0
    %v255 = vadd.f32 %v142, %v254
    %256 = vmatprep.mubr.f32.mxu0 0.0
    %257 = vmatmul.mubr.f32.gmra.mrb[0].mxu0 %v84
    %v258 = vpop.f32.mrb[0].mxu0
    %v259 = vadd.f32 %v138, %v258
    %v260 = vpop.f32.mrb[0].mxu0
    %v261 = vadd.f32 %v142, %v260
    %262 = vdwg.mxu0
    %263 = vmatprep.subr.mxu0 0.0
    %264 = vmatpush1.msra.mxu0 %v87
    %265 = vmatprep.subr.mxu0 0.0
    %266 = vmatpush1.msra.mxu0 %v90
    %267 = vmatprep.subr.mxu0 0.0
    %268 = vmatpush1.msra.mxu0 %v93
    %269 = vmatprep.subr.mxu0 0.0
    %270 = vmatpush1.msra.mxu0 %v96
    %271 = vmatprep.subr.mxu0 0.0
    %272 = vmatpush1.msra.mxu0 %v99
    %273 = vmatprep.subr.mxu0 0.0
    %274 = vmatpush1.msra.mxu0 %v102
    %275 = vmatprep.subr.mxu0 0.0
    %276 = vmatpush1.msra.mxu0 %v105
    %277 = vmatprep.subr.mxu0 0.0
    %278 = vmatpush1.msra.mxu0 %v108
    %279 = vmatprep.subr.mxu0 0.0
    %280 = vmatpush1.msra.mxu0 %v111
    %281 = vmatprep.subr.mxu0 0.0
    %282 = vmatpush1.msra.mxu0 %v114
    %283 = vmatprep.subr.mxu0 0.0
    %284 = vmatpush1.msra.mxu0 %v117
    %285 = vmatprep.subr.mxu0 0.0
    %286 = vmatpush1.msra.mxu0 %v120
    %287 = vmatprep.subr.mxu0 0.0
    %288 = vmatpush1.msra.mxu0 %v123
    %289 = vmatprep.subr.mxu0 0.0
    %290 = vmatpush1.msra.mxu0 %v126
    %291 = vmatprep.subr.mxu0 0.0
    %292 = vmatpush1.msra.mxu0 %v129
    %293 = vmatprep.subr.mxu0 0.0
    %294 = vmatpush1.msra.mxu0 %v132
    %295 = vmatprep.subr.mxu0 0.0
    %296 = vmatpush1.msra.mxu0 0.0
    %297 = vmatprep.subr.mxu0 0.0
    %298 = vmatpush1.msra.mxu0 0.0
    %299 = vmatprep.subr.mxu0 0.0
    %300 = vmatpush1.msra.mxu0 0.0
    %301 = vmatprep.subr.mxu0 0.0
    %302 = vmatpush1.msra.mxu0 0.0
    %303 = vmatprep.subr.mxu0 0.0
    %304 = vmatpush1.msra.mxu0 0.0
    %305 = vmatprep.subr.mxu0 0.0
    %306 = vmatpush1.msra.mxu0 0.0
    %307 = vmatprep.subr.mxu0 0.0
    %308 = vmatpush1.msra.mxu0 0.0
    %309 = vmatprep.subr.mxu0 0.0
    %310 = vmatpush1.msra.mxu0 0.0
    %311 = vmatprep.subr.mxu0 0.0
    %312 = vmatpush1.msra.mxu0 0.0
    %313 = vmatprep.subr.mxu0 0.0
    %314 = vmatpush1.msra.mxu0 0.0
    %315 = vmatprep.subr.mxu0 0.0
    %316 = vmatpush1.msra.mxu0 0.0
    %317 = vmatprep.subr.mxu0 0.0
    %318 = vmatpush1.msra.mxu0 0.0
    %319 = vmatprep.subr.mxu0 0.0
    %320 = vmatpush1.msra.mxu0 0.0
    %321 = vmatprep.subr.mxu0 0.0
    %322 = vmatpush1.msra.mxu0 0.0
    %323 = vmatprep.subr.mxu0 0.0
    %324 = vmatpush1.msra.mxu0 0.0
    %325 = vmatprep.subr.mxu0 0.0
    %326 = vmatpush1.msra.mxu0 0.0
    %327 = vmatprep.mubr.f32.mxu0 0.0
    %328 = vmatmul.mubr.f32.gmra.mrb[0].mxu0 %v77
    %v329 = vpop.f32.mrb[0].mxu0
    %v330 = vadd.f32 %v146, %v329
    %v331 = vpop.f32.mrb[0].mxu0
    %332 = vmatprep.mubr.f32.mxu0 0.0
    %333 = vmatmul.mubr.f32.gmra.mrb[0].mxu0 %v78
    %v334 = vpop.f32.mrb[0].mxu0
    %v335 = vadd.f32 %v146, %v334
    %v336 = vpop.f32.mrb[0].mxu0
    %337 = vmatprep.mubr.f32.mxu0 0.0
    %338 = vmatmul.mubr.f32.gmra.mrb[0].mxu0 %v79
    %v339 = vpop.f32.mrb[0].mxu0
    %v340 = vadd.f32 %v146, %v339
    %v341 = vpop.f32.mrb[0].mxu0
    %342 = vmatprep.mubr.f32.mxu0 0.0
    %343 = vmatmul.mubr.f32.gmra.mrb[0].mxu0 %v80
    %v344 = vpop.f32.mrb[0].mxu0
    %v345 = vadd.f32 %v146, %v344
    %v346 = vpop.f32.mrb[0].mxu0
    %347 = vmatprep.mubr.f32.mxu0 0.0
    %348 = vmatmul.mubr.f32.gmra.mrb[0].mxu0 %v81
    %v349 = vpop.f32.mrb[0].mxu0
    %v350 = vadd.f32 %v146, %v349
    %v351 = vpop.f32.mrb[0].mxu0
    %352 = vmatprep.mubr.f32.mxu0 0.0
    %353 = vmatmul.mubr.f32.gmra.mrb[0].mxu0 %v82
    %v354 = vpop.f32.mrb[0].mxu0
    %v355 = vadd.f32 %v146, %v354
    %v356 = vpop.f32.mrb[0].mxu0
    %357 = vmatprep.mubr.f32.mxu0 0.0
    %358 = vmatmul.mubr.f32.gmra.mrb[0].mxu0 %v83
    %v359 = vpop.f32.mrb[0].mxu0
    %v360 = vadd.f32 %v146, %v359
    %v361 = vpop.f32.mrb[0].mxu0
    %362 = vmatprep.mubr.f32.mxu0 0.0
    %363 = vmatmul.mubr.f32.gmra.mrb[0].mxu0 %v84
    %v364 = vpop.f32.mrb[0].mxu0
    %v365 = vadd.f32 %v146, %v364
    %v366 = vpop.f32.mrb[0].mxu0
    %367 = vdwg.mxu0
    %368 = vst [vmem:[#allocation2] sm:$0xff] %v217
    %369 = vst [vmem:[#allocation2 + $0x8] sm:$0xff] %v219
    %370 = vst [vmem:[#allocation2 + $0x10] sm:$0xff] %v330
    %371 = vst [vmem:[#allocation2 + $0x18] sm:$0xff] %v223
    %372 = vst [vmem:[#allocation2 + $0x20] sm:$0xff] %v225
    %373 = vst [vmem:[#allocation2 + $0x28] sm:$0xff] %v335
    %374 = vst [vmem:[#allocation2 + $0x30] sm:$0xff] %v229
    %375 = vst [vmem:[#allocation2 + $0x38] sm:$0xff] %v231
    %376 = vst [vmem:[#allocation2 + $0x40] sm:$0xff] %v340
    %377 = vst [vmem:[#allocation2 + $0x48] sm:$0xff] %v235
    %378 = vst [vmem:[#allocation2 + $0x50] sm:$0xff] %v237
    %379 = vst [vmem:[#allocation2 + $0x58] sm:$0xff] %v345
    %380 = vst [vmem:[#allocation2 + $0x60] sm:$0xff] %v241
    %381 = vst [vmem:[#allocation2 + $0x68] sm:$0xff] %v243
    %382 = vst [vmem:[#allocation2 + $0x70] sm:$0xff] %v350
    %383 = vst [vmem:[#allocation2 + $0x78] sm:$0xff] %v247
    %384 = vst [vmem:[#allocation2 + $0x80] sm:$0xff] %v249
    %385 = vst [vmem:[#allocation2 + $0x88] sm:$0xff] %v355
    %386 = vst [vmem:[#allocation2 + $0x90] sm:$0xff] %v253
    %387 = vst [vmem:[#allocation2 + $0x98] sm:$0xff] %v255
    %388 = vst [vmem:[#allocation2 + $0xa0] sm:$0xff] %v360
    %389 = vst [vmem:[#allocation2 + $0xa8] sm:$0xff] %v259
    %390 = vst [vmem:[#allocation2 + $0xb0] sm:$0xff] %v261
    %391 = vst [vmem:[#allocation2 + $0xb8] sm:$0xff] %v365
    %v392 = vld [vmem:[#allocation9] sm:$0xff]
    %v393 = vld [vmem:[#allocation9 + $0x8] sm:$0xff]
    %v394 = vld [vmem:[#allocation9 + $0x10] sm:$0xff]
    %v395 = vld [vmem:[#allocation9 + $0x18] sm:$0xff]
    %v396 = vld [vmem:[#allocation9 + $0x20] sm:$0xff]
    %v397 = vld [vmem:[#allocation9 + $0x28] sm:$0xff]
    %v398 = vld [vmem:[#allocation9 + $0x30] sm:$0xff]
    %v399 = vld [vmem:[#allocation9 + $0x38] sm:$0xff]
    %v400 = vld [vmem:[#allocation9 + $0x40] sm:$0xff]
    %v401 = vld [vmem:[#allocation9 + $0x48] sm:$0xff]
    %v402 = vld [vmem:[#allocation9 + $0x50] sm:$0xff]
    %v403 = vld [vmem:[#allocation9 + $0x58] sm:$0xff]
    %v404 = vld [vmem:[#allocation9 + $0x60] sm:$0xff]
    %v405 = vld [vmem:[#allocation9 + $0x68] sm:$0xff]
    %v406 = vld [vmem:[#allocation9 + $0x70] sm:$0xff]
    %v407 = vld [vmem:[#allocation9 + $0x78] sm:$0xff]
    %v408 = vld [vmem:[#allocation9 + $0x80] sm:$0xff]
    %v409 = vld [vmem:[#allocation9 + $0x88] sm:$0xff]
    %v410 = vld [vmem:[#allocation9 + $0x90] sm:$0xff]
    %v411 = vld [vmem:[#allocation9 + $0x98] sm:$0xff]
    %v412 = vld [vmem:[#allocation9 + $0xa0] sm:$0xff]
    %v413 = vld [vmem:[#allocation9 + $0xa8] sm:$0xff]
    %v414 = vld [vmem:[#allocation9 + $0xb0] sm:$0xff]
    %v415 = vld [vmem:[#allocation9 + $0xb8] sm:$0xff]
    %v416 = vld [vmem:[#allocation9 + $0xc0] sm:$0xff]
    %v417 = vld [vmem:[#allocation9 + $0xc8] sm:$0xff]
    %v418 = vld [vmem:[#allocation9 + $0xd0] sm:$0xff]
    %v419 = vld [vmem:[#allocation9 + $0xd8] sm:$0xff]
    %v420 = vld [vmem:[#allocation9 + $0xe0] sm:$0xff]
    %v421 = vld [vmem:[#allocation9 + $0xe8] sm:$0xff]
    %v422 = vld [vmem:[#allocation9 + $0xf0] sm:$0xff]
    %v423 = vld [vmem:[#allocation9 + $0xf8] sm:$0xff]
    %v424 = vld [vmem:[#allocation9 + $0x100] sm:$0xff]
    %v425 = vld [vmem:[#allocation9 + $0x108] sm:$0xff]
    %v426 = vld [vmem:[#allocation9 + $0x110] sm:$0xff]
    %v427 = vld [vmem:[#allocation9 + $0x118] sm:$0xff]
    %v428 = vld [vmem:[#allocation9 + $0x120] sm:$0xff]
    %v429 = vld [vmem:[#allocation9 + $0x128] sm:$0xff]
    %v430 = vld [vmem:[#allocation9 + $0x130] sm:$0xff]
    %v431 = vld [vmem:[#allocation9 + $0x138] sm:$0xff]
    %v432 = vld [vmem:[#allocation9 + $0x140] sm:$0xff]
    %v433 = vld [vmem:[#allocation9 + $0x148] sm:$0xff]
    %v434 = vld [vmem:[#allocation9 + $0x150] sm:$0xff]
    %v435 = vld [vmem:[#allocation9 + $0x158] sm:$0xff]
    %v436 = vld [vmem:[#allocation9 + $0x160] sm:$0xff]
    %v437 = vld [vmem:[#allocation9 + $0x168] sm:$0xff]
    %v438 = vld [vmem:[#allocation9 + $0x170] sm:$0xff]
    %v439 = vld [vmem:[#allocation9 + $0x178] sm:$0xff]
    %v440 = vld [vmem:[%s5] sm:$0x7]
    %v441 = vld [vmem:[#allocation6] sm:$0xff]
    %s442 = smul.u32 0, 3
    %s443 = smul.addr %s442, 8
    %s444 = scalar_lea.vmem [#allocation2], %s443
    %v445 = vld [vmem:[%s444] sm:$0xff]
    %v446 = vld [vmem:[%s444 + $0x8] sm:$0xff]
    %v447 = vld [vmem:[%s444 + $0x10] sm:$0xff]
    %v449 = vlaneseq
    %v450 = vshrl.u32 %v449, 7
    %v451 = vsub.s32 0, %v450
    %v452 = vrot.slane %v440, %v451
    %v453 = vlaneseq
    %v454 = vshrl.u32 %v453, 7
    %v455 = vsub.s32 1, %v454
    %v456 = vrot.slane %v440, %v455
    %v457 = vlaneseq
    %v458 = vshrl.u32 %v457, 7
    %v459 = vsub.s32 2, %v458
    %v460 = vrot.slane %v440, %v459
    %464 = vmatprep.subr.mxu0 %v393
    %465 = vmatpush1.msra.mxu0 %v392
    %466 = vmatprep.subr.mxu0 %v396
    %467 = vmatpush1.msra.mxu0 %v395
    %468 = vmatprep.subr.mxu0 %v399
    %469 = vmatpush1.msra.mxu0 %v398
    %470 = vmatprep.subr.mxu0 %v402
    %471 = vmatpush1.msra.mxu0 %v401
    %472 = vmatprep.subr.mxu0 %v405
    %473 = vmatpush1.msra.mxu0 %v404
    %474 = vmatprep.subr.mxu0 %v408
    %475 = vmatpush1.msra.mxu0 %v407
    %476 = vmatprep.subr.mxu0 %v411
    %477 = vmatpush1.msra.mxu0 %v410
    %478 = vmatprep.subr.mxu0 %v414
    %479 = vmatpush1.msra.mxu0 %v413
    %480 = vmatprep.subr.mxu0 %v417
    %481 = vmatpush1.msra.mxu0 %v416
    %482 = vmatprep.subr.mxu0 %v420
    %483 = vmatpush1.msra.mxu0 %v419
    %484 = vmatprep.subr.mxu0 %v423
    %485 = vmatpush1.msra.mxu0 %v422
    %486 = vmatprep.subr.mxu0 %v426
    %487 = vmatpush1.msra.mxu0 %v425
    %488 = vmatprep.subr.mxu0 %v429
    %489 = vmatpush1.msra.mxu0 %v428
    %490 = vmatprep.subr.mxu0 %v432
    %491 = vmatpush1.msra.mxu0 %v431
    %492 = vmatprep.subr.mxu0 %v435
    %493 = vmatpush1.msra.mxu0 %v434
    %494 = vmatprep.subr.mxu0 %v438
    %495 = vmatpush1.msra.mxu0 %v437
    %496 = vmatprep.subr.mxu0 0.0
    %497 = vmatpush1.msra.mxu0 0.0
    %498 = vmatprep.subr.mxu0 0.0
    %499 = vmatpush1.msra.mxu0 0.0
    %500 = vmatprep.subr.mxu0 0.0
    %501 = vmatpush1.msra.mxu0 0.0
    %502 = vmatprep.subr.mxu0 0.0
    %503 = vmatpush1.msra.mxu0 0.0
    %504 = vmatprep.subr.mxu0 0.0
    %505 = vmatpush1.msra.mxu0 0.0
    %506 = vmatprep.subr.mxu0 0.0
    %507 = vmatpush1.msra.mxu0 0.0
    %508 = vmatprep.subr.mxu0 0.0
    %509 = vmatpush1.msra.mxu0 0.0
    %510 = vmatprep.subr.mxu0 0.0
    %511 = vmatpush1.msra.mxu0 0.0
    %512 = vmatprep.subr.mxu0 0.0
    %513 = vmatpush1.msra.mxu0 0.0
    %514 = vmatprep.subr.mxu0 0.0
    %515 = vmatpush1.msra.mxu0 0.0
    %516 = vmatprep.subr.mxu0 0.0
    %517 = vmatpush1.msra.mxu0 0.0
    %518 = vmatprep.subr.mxu0 0.0
    %519 = vmatpush1.msra.mxu0 0.0
    %520 = vmatprep.subr.mxu0 0.0
    %521 = vmatpush1.msra.mxu0 0.0
    %522 = vmatprep.subr.mxu0 0.0
    %523 = vmatpush1.msra.mxu0 0.0
    %524 = vmatprep.subr.mxu0 0.0
    %525 = vmatpush1.msra.mxu0 0.0
    %526 = vmatprep.subr.mxu0 0.0
    %527 = vmatpush1.msra.mxu0 0.0
    %528 = vmatprep.mubr.f32.mxu0 0.0
    %529 = vmatmul.mubr.f32.gmra.mrb[0].mxu0 %v441
    %v530 = vpop.f32.mrb[0].mxu0
    %v531 = vadd.f32 %v452, %v530
    %v532 = vpop.f32.mrb[0].mxu0
    %v533 = vadd.f32 %v456, %v532
    %534 = vdwg.mxu0
    %535 = vmatprep.subr.mxu0 0.0
    %536 = vmatpush1.msra.mxu0 %v394
    %537 = vmatprep.subr.mxu0 0.0
    %538 = vmatpush1.msra.mxu0 %v397
    %539 = vmatprep.subr.mxu0 0.0
    %540 = vmatpush1.msra.mxu0 %v400
    %541 = vmatprep.subr.mxu0 0.0
    %542 = vmatpush1.msra.mxu0 %v403
    %543 = vmatprep.subr.mxu0 0.0
    %544 = vmatpush1.msra.mxu0 %v406
    %545 = vmatprep.subr.mxu0 0.0
    %546 = vmatpush1.msra.mxu0 %v409
    %547 = vmatprep.subr.mxu0 0.0
    %548 = vmatpush1.msra.mxu0 %v412
    %549 = vmatprep.subr.mxu0 0.0
    %550 = vmatpush1.msra.mxu0 %v415
    %551 = vmatprep.subr.mxu0 0.0
    %552 = vmatpush1.msra.mxu0 %v418
    %553 = vmatprep.subr.mxu0 0.0
    %554 = vmatpush1.msra.mxu0 %v421
    %555 = vmatprep.subr.mxu0 0.0
    %556 = vmatpush1.msra.mxu0 %v424
    %557 = vmatprep.subr.mxu0 0.0
    %558 = vmatpush1.msra.mxu0 %v427
    %559 = vmatprep.subr.mxu0 0.0
    %560 = vmatpush1.msra.mxu0 %v430
    %561 = vmatprep.subr.mxu0 0.0
    %562 = vmatpush1.msra.mxu0 %v433
    %563 = vmatprep.subr.mxu0 0.0
    %564 = vmatpush1.msra.mxu0 %v436
    %565 = vmatprep.subr.mxu0 0.0
    %566 = vmatpush1.msra.mxu0 %v439
    %567 = vmatprep.subr.mxu0 0.0
    %568 = vmatpush1.msra.mxu0 0.0
    %569 = vmatprep.subr.mxu0 0.0
    %570 = vmatpush1.msra.mxu0 0.0
    %571 = vmatprep.subr.mxu0 0.0
    %572 = vmatpush1.msra.mxu0 0.0
    %573 = vmatprep.subr.mxu0 0.0
    %574 = vmatpush1.msra.mxu0 0.0
    %575 = vmatprep.subr.mxu0 0.0
    %576 = vmatpush1.msra.mxu0 0.0
    %577 = vmatprep.subr.mxu0 0.0
    %578 = vmatpush1.msra.mxu0 0.0
    %579 = vmatprep.subr.mxu0 0.0
    %580 = vmatpush1.msra.mxu0 0.0
    %581 = vmatprep.subr.mxu0 0.0
    %582 = vmatpush1.msra.mxu0 0.0
    %583 = vmatprep.subr.mxu0 0.0
    %584 = vmatpush1.msra.mxu0 0.0
    %585 = vmatprep.subr.mxu0 0.0
    %586 = vmatpush1.msra.mxu0 0.0
    %587 = vmatprep.subr.mxu0 0.0
    %588 = vmatpush1.msra.mxu0 0.0
    %589 = vmatprep.subr.mxu0 0.0
    %590 = vmatpush1.msra.mxu0 0.0
    %591 = vmatprep.subr.mxu0 0.0
    %592 = vmatpush1.msra.mxu0 0.0
    %593 = vmatprep.subr.mxu0 0.0
    %594 = vmatpush1.msra.mxu0 0.0
    %595 = vmatprep.subr.mxu0 0.0
    %596 = vmatpush1.msra.mxu0 0.0
    %597 = vmatprep.subr.mxu0 0.0
    %598 = vmatpush1.msra.mxu0 0.0
    %599 = vmatprep.mubr.f32.mxu0 0.0
    %600 = vmatmul.mubr.f32.gmra.mrb[0].mxu0 %v441
    %v601 = vpop.f32.mrb[0].mxu0
    %v602 = vadd.f32 %v460, %v601
    %v603 = vpop.f32.mrb[0].mxu0
    %604 = vdwg.mxu0
    %v605 = vadd.f32 %v445, %v531
    %v606 = vxor.u32 %v605, 2147483648
    %v607 = vmul.f32 %v606, 1.442695
    %v608 = vpow.pop %v607
    %v609 = vadd.f32 %v608, 1.0
    %v610 = vrcp.pop %v609
    %v611 = vmul.f32 1.0, %v610
    %v612 = vadd.f32 %v446, %v533
    %v613 = vxor.u32 %v612, 2147483648
    %v614 = vmul.f32 %v613, 1.442695
    %v615 = vpow.pop %v614
    %v616 = vadd.f32 %v615, 1.0
    %v617 = vrcp.pop %v616
    %v618 = vmul.f32 1.0, %v617
    %v619 = vmul.f32 %v611, %v602
    %v620 = vadd.f32 %v447, %v619
    %v621 = vtanh.pop %v620
    %v622 = vsub.f32 1.0, %v618
    %v623 = vmul.f32 %v622, %v621
    %v624 = vmul.f32 %v618, %v441
    %v625 = vadd.f32 %v623, %v624
    %626 = vst [vmem:[#allocation11] sm:$0xff] %v625
    %s627 = smul.u32 1, 3
    %s628 = smul.addr %s627, 8
    %s629 = scalar_lea.vmem [#allocation2], %s628
    %v630 = vld [vmem:[%s629] sm:$0xff]
    %v631 = vld [vmem:[%s629 + $0x8] sm:$0xff]
    %v632 = vld [vmem:[%s629 + $0x10] sm:$0xff]
    %633 = vmatprep.subr.mxu0 %v393
    %634 = vmatpush1.msra.mxu0 %v392
    %635 = vmatprep.subr.mxu0 %v396
    %636 = vmatpush1.msra.mxu0 %v395
    %637 = vmatprep.subr.mxu0 %v399
    %638 = vmatpush1.msra.mxu0 %v398
    %639 = vmatprep.subr.mxu0 %v402
    %640 = vmatpush1.msra.mxu0 %v401
    %641 = vmatprep.subr.mxu0 %v405
    %642 = vmatpush1.msra.mxu0 %v404
    %643 = vmatprep.subr.mxu0 %v408
    %644 = vmatpush1.msra.mxu0 %v407
    %645 = vmatprep.subr.mxu0 %v411
    %646 = vmatpush1.msra.mxu0 %v410
    %647 = vmatprep.subr.mxu0 %v414
    %648 = vmatpush1.msra.mxu0 %v413
    %649 = vmatprep.subr.mxu0 %v417
    %650 = vmatpush1.msra.mxu0 %v416
    %651 = vmatprep.subr.mxu0 %v420
    %652 = vmatpush1.msra.mxu0 %v419
    %653 = vmatprep.subr.mxu0 %v423
    %654 = vmatpush1.msra.mxu0 %v422
    %655 = vmatprep.subr.mxu0 %v426
    %656 = vmatpush1.msra.mxu0 %v425
    %657 = vmatprep.subr.mxu0 %v429
    %658 = vmatpush1.msra.mxu0 %v428
    %659 = vmatprep.subr.mxu0 %v432
    %660 = vmatpush1.msra.mxu0 %v431
    %661 = vmatprep.subr.mxu0 %v435
    %662 = vmatpush1.msra.mxu0 %v434
    %663 = vmatprep.subr.mxu0 %v438
    %664 = vmatpush1.msra.mxu0 %v437
    %665 = vmatprep.subr.mxu0 0.0
    %666 = vmatpush1.msra.mxu0 0.0
    %667 = vmatprep.subr.mxu0 0.0
    %668 = vmatpush1.msra.mxu0 0.0
    %669 = vmatprep.subr.mxu0 0.0
    %670 = vmatpush1.msra.mxu0 0.0
    %671 = vmatprep.subr.mxu0 0.0
    %672 = vmatpush1.msra.mxu0 0.0
    %673 = vmatprep.subr.mxu0 0.0
    %674 = vmatpush1.msra.mxu0 0.0
    %675 = vmatprep.subr.mxu0 0.0
    %676 = vmatpush1.msra.mxu0 0.0
    %677 = vmatprep.subr.mxu0 0.0
    %678 = vmatpush1.msra.mxu0 0.0
    %679 = vmatprep.subr.mxu0 0.0
    %680 = vmatpush1.msra.mxu0 0.0
    %681 = vmatprep.subr.mxu0 0.0
    %682 = vmatpush1.msra.mxu0 0.0
    %683 = vmatprep.subr.mxu0 0.0
    %684 = vmatpush1.msra.mxu0 0.0
    %685 = vmatprep.subr.mxu0 0.0
    %686 = vmatpush1.msra.mxu0 0.0
    %687 = vmatprep.subr.mxu0 0.0
    %688 = vmatpush1.msra.mxu0 0.0
    %689 = vmatprep.subr.mxu0 0.0
    %690 = vmatpush1.msra.mxu0 0.0
    %691 = vmatprep.subr.mxu0 0.0
    %692 = vmatpush1.msra.mxu0 0.0
    %693 = vmatprep.subr.mxu0 0.0
    %694 = vmatpush1.msra.mxu0 0.0
    %695 = vmatprep.subr.mxu0 0.0
    %696 = vmatpush1.msra.mxu0 0.0
    %697 = vmatprep.mubr.f32.mxu0 0.0
    %698 = vmatmul.mubr.f32.gmra.mrb[0].mxu0 %v625
    %v699 = vpop.f32.mrb[0].mxu0
    %v700 = vadd.f32 %v452, %v699
    %v701 = vpop.f32.mrb[0].mxu0
    %v702 = vadd.f32 %v456, %v701
    %703 = vdwg.mxu0
    %704 = vmatprep.subr.mxu0 0.0
    %705 = vmatpush1.msra.mxu0 %v394
    %706 = vmatprep.subr.mxu0 0.0
    %707 = vmatpush1.msra.mxu0 %v397
    %708 = vmatprep.subr.mxu0 0.0
    %709 = vmatpush1.msra.mxu0 %v400
    %710 = vmatprep.subr.mxu0 0.0
    %711 = vmatpush1.msra.mxu0 %v403
    %712 = vmatprep.subr.mxu0 0.0
    %713 = vmatpush1.msra.mxu0 %v406
    %714 = vmatprep.subr.mxu0 0.0
    %715 = vmatpush1.msra.mxu0 %v409
    %716 = vmatprep.subr.mxu0 0.0
    %717 = vmatpush1.msra.mxu0 %v412
    %718 = vmatprep.subr.mxu0 0.0
    %719 = vmatpush1.msra.mxu0 %v415
    %720 = vmatprep.subr.mxu0 0.0
    %721 = vmatpush1.msra.mxu0 %v418
    %722 = vmatprep.subr.mxu0 0.0
    %723 = vmatpush1.msra.mxu0 %v421
    %724 = vmatprep.subr.mxu0 0.0
    %725 = vmatpush1.msra.mxu0 %v424
    %726 = vmatprep.subr.mxu0 0.0
    %727 = vmatpush1.msra.mxu0 %v427
    %728 = vmatprep.subr.mxu0 0.0
    %729 = vmatpush1.msra.mxu0 %v430
    %730 = vmatprep.subr.mxu0 0.0
    %731 = vmatpush1.msra.mxu0 %v433
    %732 = vmatprep.subr.mxu0 0.0
    %733 = vmatpush1.msra.mxu0 %v436
    %734 = vmatprep.subr.mxu0 0.0
    %735 = vmatpush1.msra.mxu0 %v439
    %736 = vmatprep.subr.mxu0 0.0
    %737 = vmatpush1.msra.mxu0 0.0
    %738 = vmatprep.subr.mxu0 0.0
    %739 = vmatpush1.msra.mxu0 0.0
    %740 = vmatprep.subr.mxu0 0.0
    %741 = vmatpush1.msra.mxu0 0.0
    %742 = vmatprep.subr.mxu0 0.0
    %743 = vmatpush1.msra.mxu0 0.0
    %744 = vmatprep.subr.mxu0 0.0
    %745 = vmatpush1.msra.mxu0 0.0
    %746 = vmatprep.subr.mxu0 0.0
    %747 = vmatpush1.msra.mxu0 0.0
    %748 = vmatprep.subr.mxu0 0.0
    %749 = vmatpush1.msra.mxu0 0.0
    %750 = vmatprep.subr.mxu0 0.0
    %751 = vmatpush1.msra.mxu0 0.0
    %752 = vmatprep.subr.mxu0 0.0
    %753 = vmatpush1.msra.mxu0 0.0
    %754 = vmatprep.subr.mxu0 0.0
    %755 = vmatpush1.msra.mxu0 0.0
    %756 = vmatprep.subr.mxu0 0.0
    %757 = vmatpush1.msra.mxu0 0.0
    %758 = vmatprep.subr.mxu0 0.0
    %759 = vmatpush1.msra.mxu0 0.0
    %760 = vmatprep.subr.mxu0 0.0
    %761 = vmatpush1.msra.mxu0 0.0
    %762 = vmatprep.subr.mxu0 0.0
    %763 = vmatpush1.msra.mxu0 0.0
    %764 = vmatprep.subr.mxu0 0.0
    %765 = vmatpush1.msra.mxu0 0.0
    %766 = vmatprep.subr.mxu0 0.0
    %767 = vmatpush1.msra.mxu0 0.0
    %768 = vmatprep.mubr.f32.mxu0 0.0
    %769 = vmatmul.mubr.f32.gmra.mrb[0].mxu0 %v625
    %v770 = vpop.f32.mrb[0].mxu0
    %v771 = vadd.f32 %v460, %v770
    %v772 = vpop.f32.mrb[0].mxu0
    %773 = vdwg.mxu0
    %v774 = vadd.f32 %v630, %v700
    %v775 = vxor.u32 %v774, 2147483648
    %v776 = vmul.f32 %v775, 1.442695
    %v777 = vpow.pop %v776
    %v778 = vadd.f32 %v777, 1.0
    %v779 = vrcp.pop %v778
    %v780 = vmul.f32 1.0, %v779
    %v781 = vadd.f32 %v631, %v702
    %v782 = vxor.u32 %v781, 2147483648
    %v783 = vmul.f32 %v782, 1.442695
    %v784 = vpow.pop %v783
    %v785 = vadd.f32 %v784, 1.0
    %v786 = vrcp.pop %v785
    %v787 = vmul.f32 1.0, %v786
    %v788 = vmul.f32 %v780, %v771
    %v789 = vadd.f32 %v632, %v788
    %v790 = vtanh.pop %v789
    %v791 = vsub.f32 1.0, %v787
    %v792 = vmul.f32 %v791, %v790
    %v793 = vmul.f32 %v787, %v625
    %v794 = vadd.f32 %v792, %v793
    %s795 = scalar_lea.vmem [#allocation11], 8
    %796 = vst [vmem:[%s795] sm:$0xff] %v794
    %s797 = smul.u32 2, 3
    %s798 = smul.addr %s797, 8
    %s799 = scalar_lea.vmem [#allocation2], %s798
    %v800 = vld [vmem:[%s799] sm:$0xff]
    %v801 = vld [vmem:[%s799 + $0x8] sm:$0xff]
    %v802 = vld [vmem:[%s799 + $0x10] sm:$0xff]
    %803 = vmatprep.subr.mxu0 %v393
    %804 = vmatpush1.msra.mxu0 %v392
    %805 = vmatprep.subr.mxu0 %v396
    %806 = vmatpush1.msra.mxu0 %v395
    %807 = vmatprep.subr.mxu0 %v399
    %808 = vmatpush1.msra.mxu0 %v398
    %809 = vmatprep.subr.mxu0 %v402
    %810 = vmatpush1.msra.mxu0 %v401
    %811 = vmatprep.subr.mxu0 %v405
    %812 = vmatpush1.msra.mxu0 %v404
    %813 = vmatprep.subr.mxu0 %v408
    %814 = vmatpush1.msra.mxu0 %v407
    %815 = vmatprep.subr.mxu0 %v411
    %816 = vmatpush1.msra.mxu0 %v410
    %817 = vmatprep.subr.mxu0 %v414
    %818 = vmatpush1.msra.mxu0 %v413
    %819 = vmatprep.subr.mxu0 %v417
    %820 = vmatpush1.msra.mxu0 %v416
    %821 = vmatprep.subr.mxu0 %v420
    %822 = vmatpush1.msra.mxu0 %v419
    %823 = vmatprep.subr.mxu0 %v423
    %824 = vmatpush1.msra.mxu0 %v422
    %825 = vmatprep.subr.mxu0 %v426
    %826 = vmatpush1.msra.mxu0 %v425
    %827 = vmatprep.subr.mxu0 %v429
    %828 = vmatpush1.msra.mxu0 %v428
    %829 = vmatprep.subr.mxu0 %v432
    %830 = vmatpush1.msra.mxu0 %v431
    %831 = vmatprep.subr.mxu0 %v435
    %832 = vmatpush1.msra.mxu0 %v434
    %833 = vmatprep.subr.mxu0 %v438
    %834 = vmatpush1.msra.mxu0 %v437
    %835 = vmatprep.subr.mxu0 0.0
    %836 = vmatpush1.msra.mxu0 0.0
    %837 = vmatprep.subr.mxu0 0.0
    %838 = vmatpush1.msra.mxu0 0.0
    %839 = vmatprep.subr.mxu0 0.0
    %840 = vmatpush1.msra.mxu0 0.0
    %841 = vmatprep.subr.mxu0 0.0
    %842 = vmatpush1.msra.mxu0 0.0
    %843 = vmatprep.subr.mxu0 0.0
    %844 = vmatpush1.msra.mxu0 0.0
    %845 = vmatprep.subr.mxu0 0.0
    %846 = vmatpush1.msra.mxu0 0.0
    %847 = vmatprep.subr.mxu0 0.0
    %848 = vmatpush1.msra.mxu0 0.0
    %849 = vmatprep.subr.mxu0 0.0
    %850 = vmatpush1.msra.mxu0 0.0
    %851 = vmatprep.subr.mxu0 0.0
    %852 = vmatpush1.msra.mxu0 0.0
    %853 = vmatprep.subr.mxu0 0.0
    %854 = vmatpush1.msra.mxu0 0.0
    %855 = vmatprep.subr.mxu0 0.0
    %856 = vmatpush1.msra.mxu0 0.0
    %857 = vmatprep.subr.mxu0 0.0
    %858 = vmatpush1.msra.mxu0 0.0
    %859 = vmatprep.subr.mxu0 0.0
    %860 = vmatpush1.msra.mxu0 0.0
    %861 = vmatprep.subr.mxu0 0.0
    %862 = vmatpush1.msra.mxu0 0.0
    %863 = vmatprep.subr.mxu0 0.0
    %864 = vmatpush1.msra.mxu0 0.0
    %865 = vmatprep.subr.mxu0 0.0
    %866 = vmatpush1.msra.mxu0 0.0
    %867 = vmatprep.mubr.f32.mxu0 0.0
    %868 = vmatmul.mubr.f32.gmra.mrb[0].mxu0 %v794
    %v869 = vpop.f32.mrb[0].mxu0
    %v870 = vadd.f32 %v452, %v869
    %v871 = vpop.f32.mrb[0].mxu0
    %v872 = vadd.f32 %v456, %v871
    %873 = vdwg.mxu0
    %874 = vmatprep.subr.mxu0 0.0
    %875 = vmatpush1.msra.mxu0 %v394
    %876 = vmatprep.subr.mxu0 0.0
    %877 = vmatpush1.msra.mxu0 %v397
    %878 = vmatprep.subr.mxu0 0.0
    %879 = vmatpush1.msra.mxu0 %v400
    %880 = vmatprep.subr.mxu0 0.0
    %881 = vmatpush1.msra.mxu0 %v403
    %882 = vmatprep.subr.mxu0 0.0
    %883 = vmatpush1.msra.mxu0 %v406
    %884 = vmatprep.subr.mxu0 0.0
    %885 = vmatpush1.msra.mxu0 %v409
    %886 = vmatprep.subr.mxu0 0.0
    %887 = vmatpush1.msra.mxu0 %v412
    %888 = vmatprep.subr.mxu0 0.0
    %889 = vmatpush1.msra.mxu0 %v415
    %890 = vmatprep.subr.mxu0 0.0
    %891 = vmatpush1.msra.mxu0 %v418
    %892 = vmatprep.subr.mxu0 0.0
    %893 = vmatpush1.msra.mxu0 %v421
    %894 = vmatprep.subr.mxu0 0.0
    %895 = vmatpush1.msra.mxu0 %v424
    %896 = vmatprep.subr.mxu0 0.0
    %897 = vmatpush1.msra.mxu0 %v427
    %898 = vmatprep.subr.mxu0 0.0
    %899 = vmatpush1.msra.mxu0 %v430
    %900 = vmatprep.subr.mxu0 0.0
    %901 = vmatpush1.msra.mxu0 %v433
    %902 = vmatprep.subr.mxu0 0.0
    %903 = vmatpush1.msra.mxu0 %v436
    %904 = vmatprep.subr.mxu0 0.0
    %905 = vmatpush1.msra.mxu0 %v439
    %906 = vmatprep.subr.mxu0 0.0
    %907 = vmatpush1.msra.mxu0 0.0
    %908 = vmatprep.subr.mxu0 0.0
    %909 = vmatpush1.msra.mxu0 0.0
    %910 = vmatprep.subr.mxu0 0.0
    %911 = vmatpush1.msra.mxu0 0.0
    %912 = vmatprep.subr.mxu0 0.0
    %913 = vmatpush1.msra.mxu0 0.0
    %914 = vmatprep.subr.mxu0 0.0
    %915 = vmatpush1.msra.mxu0 0.0
    %916 = vmatprep.subr.mxu0 0.0
    %917 = vmatpush1.msra.mxu0 0.0
    %918 = vmatprep.subr.mxu0 0.0
    %919 = vmatpush1.msra.mxu0 0.0
    %920 = vmatprep.subr.mxu0 0.0
    %921 = vmatpush1.msra.mxu0 0.0
    %922 = vmatprep.subr.mxu0 0.0
    %923 = vmatpush1.msra.mxu0 0.0
    %924 = vmatprep.subr.mxu0 0.0
    %925 = vmatpush1.msra.mxu0 0.0
    %926 = vmatprep.subr.mxu0 0.0
    %927 = vmatpush1.msra.mxu0 0.0
    %928 = vmatprep.subr.mxu0 0.0
    %929 = vmatpush1.msra.mxu0 0.0
    %930 = vmatprep.subr.mxu0 0.0
    %931 = vmatpush1.msra.mxu0 0.0
    %932 = vmatprep.subr.mxu0 0.0
    %933 = vmatpush1.msra.mxu0 0.0
    %934 = vmatprep.subr.mxu0 0.0
    %935 = vmatpush1.msra.mxu0 0.0
    %936 = vmatprep.subr.mxu0 0.0
    %937 = vmatpush1.msra.mxu0 0.0
    %938 = vmatprep.mubr.f32.mxu0 0.0
    %939 = vmatmul.mubr.f32.gmra.mrb[0].mxu0 %v794
    %v940 = vpop.f32.mrb[0].mxu0
    %v941 = vadd.f32 %v460, %v940
    %v942 = vpop.f32.mrb[0].mxu0
    %943 = vdwg.mxu0
    %v944 = vadd.f32 %v800, %v870
    %v945 = vxor.u32 %v944, 2147483648
    %v946 = vmul.f32 %v945, 1.442695
    %v947 = vpow.pop %v946
    %v948 = vadd.f32 %v947, 1.0
    %v949 = vrcp.pop %v948
    %v950 = vmul.f32 1.0, %v949
    %v951 = vadd.f32 %v801, %v872
    %v952 = vxor.u32 %v951, 2147483648
    %v953 = vmul.f32 %v952, 1.442695
    %v954 = vpow.pop %v953
    %v955 = vadd.f32 %v954, 1.0
    %v956 = vrcp.pop %v955
    %v957 = vmul.f32 1.0, %v956
    %v958 = vmul.f32 %v950, %v941
    %v959 = vadd.f32 %v802, %v958
    %v960 = vtanh.pop %v959
    %v961 = vsub.f32 1.0, %v957
    %v962 = vmul.f32 %v961, %v960
    %v963 = vmul.f32 %v957, %v794
    %v964 = vadd.f32 %v962, %v963
    %s965 = scalar_lea.vmem [#allocation11], 16
    %966 = vst [vmem:[%s965] sm:$0xff] %v964
    %s967 = smul.u32 3, 3
    %s968 = smul.addr %s967, 8
    %s969 = scalar_lea.vmem [#allocation2], %s968
    %v970 = vld [vmem:[%s969] sm:$0xff]
    %v971 = vld [vmem:[%s969 + $0x8] sm:$0xff]
    %v972 = vld [vmem:[%s969 + $0x10] sm:$0xff]
    %973 = vmatprep.subr.mxu0 %v393
    %974 = vmatpush1.msra.mxu0 %v392
    %975 = vmatprep.subr.mxu0 %v396
    %976 = vmatpush1.msra.mxu0 %v395
    %977 = vmatprep.subr.mxu0 %v399
    %978 = vmatpush1.msra.mxu0 %v398
    %979 = vmatprep.subr.mxu0 %v402
    %980 = vmatpush1.msra.mxu0 %v401
    %981 = vmatprep.subr.mxu0 %v405
    %982 = vmatpush1.msra.mxu0 %v404
    %983 = vmatprep.subr.mxu0 %v408
    %984 = vmatpush1.msra.mxu0 %v407
    %985 = vmatprep.subr.mxu0 %v411
    %986 = vmatpush1.msra.mxu0 %v410
    %987 = vmatprep.subr.mxu0 %v414
    %988 = vmatpush1.msra.mxu0 %v413
    %989 = vmatprep.subr.mxu0 %v417
    %990 = vmatpush1.msra.mxu0 %v416
    %991 = vmatprep.subr.mxu0 %v420
    %992 = vmatpush1.msra.mxu0 %v419
    %993 = vmatprep.subr.mxu0 %v423
    %994 = vmatpush1.msra.mxu0 %v422
    %995 = vmatprep.subr.mxu0 %v426
    %996 = vmatpush1.msra.mxu0 %v425
    %997 = vmatprep.subr.mxu0 %v429
    %998 = vmatpush1.msra.mxu0 %v428
    %999 = vmatprep.subr.mxu0 %v432
    %1000 = vmatpush1.msra.mxu0 %v431
    %1001 = vmatprep.subr.mxu0 %v435
    %1002 = vmatpush1.msra.mxu0 %v434
    %1003 = vmatprep.subr.mxu0 %v438
    %1004 = vmatpush1.msra.mxu0 %v437
    %1005 = vmatprep.subr.mxu0 0.0
    %1006 = vmatpush1.msra.mxu0 0.0
    %1007 = vmatprep.subr.mxu0 0.0
    %1008 = vmatpush1.msra.mxu0 0.0
    %1009 = vmatprep.subr.mxu0 0.0
    %1010 = vmatpush1.msra.mxu0 0.0
    %1011 = vmatprep.subr.mxu0 0.0
    %1012 = vmatpush1.msra.mxu0 0.0
    %1013 = vmatprep.subr.mxu0 0.0
    %1014 = vmatpush1.msra.mxu0 0.0
    %1015 = vmatprep.subr.mxu0 0.0
    %1016 = vmatpush1.msra.mxu0 0.0
    %1017 = vmatprep.subr.mxu0 0.0
    %1018 = vmatpush1.msra.mxu0 0.0
    %1019 = vmatprep.subr.mxu0 0.0
    %1020 = vmatpush1.msra.mxu0 0.0
    %1021 = vmatprep.subr.mxu0 0.0
    %1022 = vmatpush1.msra.mxu0 0.0
    %1023 = vmatprep.subr.mxu0 0.0
    %1024 = vmatpush1.msra.mxu0 0.0
    %1025 = vmatprep.subr.mxu0 0.0
    %1026 = vmatpush1.msra.mxu0 0.0
    %1027 = vmatprep.subr.mxu0 0.0
    %1028 = vmatpush1.msra.mxu0 0.0
    %1029 = vmatprep.subr.mxu0 0.0
    %1030 = vmatpush1.msra.mxu0 0.0
    %1031 = vmatprep.subr.mxu0 0.0
    %1032 = vmatpush1.msra.mxu0 0.0
    %1033 = vmatprep.subr.mxu0 0.0
    %1034 = vmatpush1.msra.mxu0 0.0
    %1035 = vmatprep.subr.mxu0 0.0
    %1036 = vmatpush1.msra.mxu0 0.0
    %1037 = vmatprep.mubr.f32.mxu0 0.0
    %1038 = vmatmul.mubr.f32.gmra.mrb[0].mxu0 %v964
    %v1039 = vpop.f32.mrb[0].mxu0
    %v1040 = vadd.f32 %v452, %v1039
    %v1041 = vpop.f32.mrb[0].mxu0
    %v1042 = vadd.f32 %v456, %v1041
    %1043 = vdwg.mxu0
    %1044 = vmatprep.subr.mxu0 0.0
    %1045 = vmatpush1.msra.mxu0 %v394
    %1046 = vmatprep.subr.mxu0 0.0
    %1047 = vmatpush1.msra.mxu0 %v397
    %1048 = vmatprep.subr.mxu0 0.0
    %1049 = vmatpush1.msra.mxu0 %v400
    %1050 = vmatprep.subr.mxu0 0.0
    %1051 = vmatpush1.msra.mxu0 %v403
    %1052 = vmatprep.subr.mxu0 0.0
    %1053 = vmatpush1.msra.mxu0 %v406
    %1054 = vmatprep.subr.mxu0 0.0
    %1055 = vmatpush1.msra.mxu0 %v409
    %1056 = vmatprep.subr.mxu0 0.0
    %1057 = vmatpush1.msra.mxu0 %v412
    %1058 = vmatprep.subr.mxu0 0.0
    %1059 = vmatpush1.msra.mxu0 %v415
    %1060 = vmatprep.subr.mxu0 0.0
    %1061 = vmatpush1.msra.mxu0 %v418
    %1062 = vmatprep.subr.mxu0 0.0
    %1063 = vmatpush1.msra.mxu0 %v421
    %1064 = vmatprep.subr.mxu0 0.0
    %1065 = vmatpush1.msra.mxu0 %v424
    %1066 = vmatprep.subr.mxu0 0.0
    %1067 = vmatpush1.msra.mxu0 %v427
    %1068 = vmatprep.subr.mxu0 0.0
    %1069 = vmatpush1.msra.mxu0 %v430
    %1070 = vmatprep.subr.mxu0 0.0
    %1071 = vmatpush1.msra.mxu0 %v433
    %1072 = vmatprep.subr.mxu0 0.0
    %1073 = vmatpush1.msra.mxu0 %v436
    %1074 = vmatprep.subr.mxu0 0.0
    %1075 = vmatpush1.msra.mxu0 %v439
    %1076 = vmatprep.subr.mxu0 0.0
    %1077 = vmatpush1.msra.mxu0 0.0
    %1078 = vmatprep.subr.mxu0 0.0
    %1079 = vmatpush1.msra.mxu0 0.0
    %1080 = vmatprep.subr.mxu0 0.0
    %1081 = vmatpush1.msra.mxu0 0.0
    %1082 = vmatprep.subr.mxu0 0.0
    %1083 = vmatpush1.msra.mxu0 0.0
    %1084 = vmatprep.subr.mxu0 0.0
    %1085 = vmatpush1.msra.mxu0 0.0
    %1086 = vmatprep.subr.mxu0 0.0
    %1087 = vmatpush1.msra.mxu0 0.0
    %1088 = vmatprep.subr.mxu0 0.0
    %1089 = vmatpush1.msra.mxu0 0.0
    %1090 = vmatprep.subr.mxu0 0.0
    %1091 = vmatpush1.msra.mxu0 0.0
    %1092 = vmatprep.subr.mxu0 0.0
    %1093 = vmatpush1.msra.mxu0 0.0
    %1094 = vmatprep.subr.mxu0 0.0
    %1095 = vmatpush1.msra.mxu0 0.0
    %1096 = vmatprep.subr.mxu0 0.0
    %1097 = vmatpush1.msra.mxu0 0.0
    %1098 = vmatprep.subr.mxu0 0.0
    %1099 = vmatpush1.msra.mxu0 0.0
    %1100 = vmatprep.subr.mxu0 0.0
    %1101 = vmatpush1.msra.mxu0 0.0
    %1102 = vmatprep.subr.mxu0 0.0
    %1103 = vmatpush1.msra.mxu0 0.0
    %1104 = vmatprep.subr.mxu0 0.0
    %1105 = vmatpush1.msra.mxu0 0.0
    %1106 = vmatprep.subr.mxu0 0.0
    %1107 = vmatpush1.msra.mxu0 0.0
    %1108 = vmatprep.mubr.f32.mxu0 0.0
    %1109 = vmatmul.mubr.f32.gmra.mrb[0].mxu0 %v964
    %v1110 = vpop.f32.mrb[0].mxu0
    %v1111 = vadd.f32 %v460, %v1110
    %v1112 = vpop.f32.mrb[0].mxu0
    %1113 = vdwg.mxu0
    %v1114 = vadd.f32 %v970, %v1040
    %v1115 = vxor.u32 %v1114, 2147483648
    %v1116 = vmul.f32 %v1115, 1.442695
    %v1117 = vpow.pop %v1116
    %v1118 = vadd.f32 %v1117, 1.0
    %v1119 = vrcp.pop %v1118
    %v1120 = vmul.f32 1.0, %v1119
    %v1121 = vadd.f32 %v971, %v1042
    %v1122 = vxor.u32 %v1121, 2147483648
    %v1123 = vmul.f32 %v1122, 1.442695
    %v1124 = vpow.pop %v1123
    %v1125 = vadd.f32 %v1124, 1.0
    %v1126 = vrcp.pop %v1125
    %v1127 = vmul.f32 1.0, %v1126
    %v1128 = vmul.f32 %v1120, %v1111
    %v1129 = vadd.f32 %v972, %v1128
    %v1130 = vtanh.pop %v1129
    %v1131 = vsub.f32 1.0, %v1127
    %v1132 = vmul.f32 %v1131, %v1130
    %v1133 = vmul.f32 %v1127, %v964
    %v1134 = vadd.f32 %v1132, %v1133
    %s1135 = scalar_lea.vmem [#allocation11], 24
    %1136 = vst [vmem:[%s1135] sm:$0xff] %v1134
    %s1137 = smul.u32 4, 3
    %s1138 = smul.addr %s1137, 8
    %s1139 = scalar_lea.vmem [#allocation2], %s1138
    %v1140 = vld [vmem:[%s1139] sm:$0xff]
    %v1141 = vld [vmem:[%s1139 + $0x8] sm:$0xff]
    %v1142 = vld [vmem:[%s1139 + $0x10] sm:$0xff]
    %1143 = vmatprep.subr.mxu0 %v393
    %1144 = vmatpush1.msra.mxu0 %v392
    %1145 = vmatprep.subr.mxu0 %v396
    %1146 = vmatpush1.msra.mxu0 %v395
    %1147 = vmatprep.subr.mxu0 %v399
    %1148 = vmatpush1.msra.mxu0 %v398
    %1149 = vmatprep.subr.mxu0 %v402
    %1150 = vmatpush1.msra.mxu0 %v401
    %1151 = vmatprep.subr.mxu0 %v405
    %1152 = vmatpush1.msra.mxu0 %v404
    %1153 = vmatprep.subr.mxu0 %v408
    %1154 = vmatpush1.msra.mxu0 %v407
    %1155 = vmatprep.subr.mxu0 %v411
    %1156 = vmatpush1.msra.mxu0 %v410
    %1157 = vmatprep.subr.mxu0 %v414
    %1158 = vmatpush1.msra.mxu0 %v413
    %1159 = vmatprep.subr.mxu0 %v417
    %1160 = vmatpush1.msra.mxu0 %v416
    %1161 = vmatprep.subr.mxu0 %v420
    %1162 = vmatpush1.msra.mxu0 %v419
    %1163 = vmatprep.subr.mxu0 %v423
    %1164 = vmatpush1.msra.mxu0 %v422
    %1165 = vmatprep.subr.mxu0 %v426
    %1166 = vmatpush1.msra.mxu0 %v425
    %1167 = vmatprep.subr.mxu0 %v429
    %1168 = vmatpush1.msra.mxu0 %v428
    %1169 = vmatprep.subr.mxu0 %v432
    %1170 = vmatpush1.msra.mxu0 %v431
    %1171 = vmatprep.subr.mxu0 %v435
    %1172 = vmatpush1.msra.mxu0 %v434
    %1173 = vmatprep.subr.mxu0 %v438
    %1174 = vmatpush1.msra.mxu0 %v437
    %1175 = vmatprep.subr.mxu0 0.0
    %1176 = vmatpush1.msra.mxu0 0.0
    %1177 = vmatprep.subr.mxu0 0.0
    %1178 = vmatpush1.msra.mxu0 0.0
    %1179 = vmatprep.subr.mxu0 0.0
    %1180 = vmatpush1.msra.mxu0 0.0
    %1181 = vmatprep.subr.mxu0 0.0
    %1182 = vmatpush1.msra.mxu0 0.0
    %1183 = vmatprep.subr.mxu0 0.0
    %1184 = vmatpush1.msra.mxu0 0.0
    %1185 = vmatprep.subr.mxu0 0.0
    %1186 = vmatpush1.msra.mxu0 0.0
    %1187 = vmatprep.subr.mxu0 0.0
    %1188 = vmatpush1.msra.mxu0 0.0
    %1189 = vmatprep.subr.mxu0 0.0
    %1190 = vmatpush1.msra.mxu0 0.0
    %1191 = vmatprep.subr.mxu0 0.0
    %1192 = vmatpush1.msra.mxu0 0.0
    %1193 = vmatprep.subr.mxu0 0.0
    %1194 = vmatpush1.msra.mxu0 0.0
    %1195 = vmatprep.subr.mxu0 0.0
    %1196 = vmatpush1.msra.mxu0 0.0
    %1197 = vmatprep.subr.mxu0 0.0
    %1198 = vmatpush1.msra.mxu0 0.0
    %1199 = vmatprep.subr.mxu0 0.0
    %1200 = vmatpush1.msra.mxu0 0.0
    %1201 = vmatprep.subr.mxu0 0.0
    %1202 = vmatpush1.msra.mxu0 0.0
    %1203 = vmatprep.subr.mxu0 0.0
    %1204 = vmatpush1.msra.mxu0 0.0
    %1205 = vmatprep.subr.mxu0 0.0
    %1206 = vmatpush1.msra.mxu0 0.0
    %1207 = vmatprep.mubr.f32.mxu0 0.0
    %1208 = vmatmul.mubr.f32.gmra.mrb[0].mxu0 %v1134
    %v1209 = vpop.f32.mrb[0].mxu0
    %v1210 = vadd.f32 %v452, %v1209
    %v1211 = vpop.f32.mrb[0].mxu0
    %v1212 = vadd.f32 %v456, %v1211
    %1213 = vdwg.mxu0
    %1214 = vmatprep.subr.mxu0 0.0
    %1215 = vmatpush1.msra.mxu0 %v394
    %1216 = vmatprep.subr.mxu0 0.0
    %1217 = vmatpush1.msra.mxu0 %v397
    %1218 = vmatprep.subr.mxu0 0.0
    %1219 = vmatpush1.msra.mxu0 %v400
    %1220 = vmatprep.subr.mxu0 0.0
    %1221 = vmatpush1.msra.mxu0 %v403
    %1222 = vmatprep.subr.mxu0 0.0
    %1223 = vmatpush1.msra.mxu0 %v406
    %1224 = vmatprep.subr.mxu0 0.0
    %1225 = vmatpush1.msra.mxu0 %v409
    %1226 = vmatprep.subr.mxu0 0.0
    %1227 = vmatpush1.msra.mxu0 %v412
    %1228 = vmatprep.subr.mxu0 0.0
    %1229 = vmatpush1.msra.mxu0 %v415
    %1230 = vmatprep.subr.mxu0 0.0
    %1231 = vmatpush1.msra.mxu0 %v418
    %1232 = vmatprep.subr.mxu0 0.0
    %1233 = vmatpush1.msra.mxu0 %v421
    %1234 = vmatprep.subr.mxu0 0.0
    %1235 = vmatpush1.msra.mxu0 %v424
    %1236 = vmatprep.subr.mxu0 0.0
    %1237 = vmatpush1.msra.mxu0 %v427
    %1238 = vmatprep.subr.mxu0 0.0
    %1239 = vmatpush1.msra.mxu0 %v430
    %1240 = vmatprep.subr.mxu0 0.0
    %1241 = vmatpush1.msra.mxu0 %v433
    %1242 = vmatprep.subr.mxu0 0.0
    %1243 = vmatpush1.msra.mxu0 %v436
    %1244 = vmatprep.subr.mxu0 0.0
    %1245 = vmatpush1.msra.mxu0 %v439
    %1246 = vmatprep.subr.mxu0 0.0
    %1247 = vmatpush1.msra.mxu0 0.0
    %1248 = vmatprep.subr.mxu0 0.0
    %1249 = vmatpush1.msra.mxu0 0.0
    %1250 = vmatprep.subr.mxu0 0.0
    %1251 = vmatpush1.msra.mxu0 0.0
    %1252 = vmatprep.subr.mxu0 0.0
    %1253 = vmatpush1.msra.mxu0 0.0
    %1254 = vmatprep.subr.mxu0 0.0
    %1255 = vmatpush1.msra.mxu0 0.0
    %1256 = vmatprep.subr.mxu0 0.0
    %1257 = vmatpush1.msra.mxu0 0.0
    %1258 = vmatprep.subr.mxu0 0.0
    %1259 = vmatpush1.msra.mxu0 0.0
    %1260 = vmatprep.subr.mxu0 0.0
    %1261 = vmatpush1.msra.mxu0 0.0
    %1262 = vmatprep.subr.mxu0 0.0
    %1263 = vmatpush1.msra.mxu0 0.0
    %1264 = vmatprep.subr.mxu0 0.0
    %1265 = vmatpush1.msra.mxu0 0.0
    %1266 = vmatprep.subr.mxu0 0.0
    %1267 = vmatpush1.msra.mxu0 0.0
    %1268 = vmatprep.subr.mxu0 0.0
    %1269 = vmatpush1.msra.mxu0 0.0
    %1270 = vmatprep.subr.mxu0 0.0
    %1271 = vmatpush1.msra.mxu0 0.0
    %1272 = vmatprep.subr.mxu0 0.0
    %1273 = vmatpush1.msra.mxu0 0.0
    %1274 = vmatprep.subr.mxu0 0.0
    %1275 = vmatpush1.msra.mxu0 0.0
    %1276 = vmatprep.subr.mxu0 0.0
    %1277 = vmatpush1.msra.mxu0 0.0
    %1278 = vmatprep.mubr.f32.mxu0 0.0
    %1279 = vmatmul.mubr.f32.gmra.mrb[0].mxu0 %v1134
    %v1280 = vpop.f32.mrb[0].mxu0
    %v1281 = vadd.f32 %v460, %v1280
    %v1282 = vpop.f32.mrb[0].mxu0
    %1283 = vdwg.mxu0
    %v1284 = vadd.f32 %v1140, %v1210
    %v1285 = vxor.u32 %v1284, 2147483648
    %v1286 = vmul.f32 %v1285, 1.442695
    %v1287 = vpow.pop %v1286
    %v1288 = vadd.f32 %v1287, 1.0
    %v1289 = vrcp.pop %v1288
    %v1290 = vmul.f32 1.0, %v1289
    %v1291 = vadd.f32 %v1141, %v1212
    %v1292 = vxor.u32 %v1291, 2147483648
    %v1293 = vmul.f32 %v1292, 1.442695
    %v1294 = vpow.pop %v1293
    %v1295 = vadd.f32 %v1294, 1.0
    %v1296 = vrcp.pop %v1295
    %v1297 = vmul.f32 1.0, %v1296
    %v1298 = vmul.f32 %v1290, %v1281
    %v1299 = vadd.f32 %v1142, %v1298
    %v1300 = vtanh.pop %v1299
    %v1301 = vsub.f32 1.0, %v1297
    %v1302 = vmul.f32 %v1301, %v1300
    %v1303 = vmul.f32 %v1297, %v1134
    %v1304 = vadd.f32 %v1302, %v1303
    %s1305 = scalar_lea.vmem [#allocation11], 32
    %1306 = vst [vmem:[%s1305] sm:$0xff] %v1304
    %s1307 = smul.u32 5, 3
    %s1308 = smul.addr %s1307, 8
    %s1309 = scalar_lea.vmem [#allocation2], %s1308
    %v1310 = vld [vmem:[%s1309] sm:$0xff]
    %v1311 = vld [vmem:[%s1309 + $0x8] sm:$0xff]
    %v1312 = vld [vmem:[%s1309 + $0x10] sm:$0xff]
    %1313 = vmatprep.subr.mxu0 %v393
    %1314 = vmatpush1.msra.mxu0 %v392
    %1315 = vmatprep.subr.mxu0 %v396
    %1316 = vmatpush1.msra.mxu0 %v395
    %1317 = vmatprep.subr.mxu0 %v399
    %1318 = vmatpush1.msra.mxu0 %v398
    %1319 = vmatprep.subr.mxu0 %v402
    %1320 = vmatpush1.msra.mxu0 %v401
    %1321 = vmatprep.subr.mxu0 %v405
    %1322 = vmatpush1.msra.mxu0 %v404
    %1323 = vmatprep.subr.mxu0 %v408
    %1324 = vmatpush1.msra.mxu0 %v407
    %1325 = vmatprep.subr.mxu0 %v411
    %1326 = vmatpush1.msra.mxu0 %v410
    %1327 = vmatprep.subr.mxu0 %v414
    %1328 = vmatpush1.msra.mxu0 %v413
    %1329 = vmatprep.subr.mxu0 %v417
    %1330 = vmatpush1.msra.mxu0 %v416
    %1331 = vmatprep.subr.mxu0 %v420
    %1332 = vmatpush1.msra.mxu0 %v419
    %1333 = vmatprep.subr.mxu0 %v423
    %1334 = vmatpush1.msra.mxu0 %v422
    %1335 = vmatprep.subr.mxu0 %v426
    %1336 = vmatpush1.msra.mxu0 %v425
    %1337 = vmatprep.subr.mxu0 %v429
    %1338 = vmatpush1.msra.mxu0 %v428
    %1339 = vmatprep.subr.mxu0 %v432
    %1340 = vmatpush1.msra.mxu0 %v431
    %1341 = vmatprep.subr.mxu0 %v435
    %1342 = vmatpush1.msra.mxu0 %v434
    %1343 = vmatprep.subr.mxu0 %v438
    %1344 = vmatpush1.msra.mxu0 %v437
    %1345 = vmatprep.subr.mxu0 0.0
    %1346 = vmatpush1.msra.mxu0 0.0
    %1347 = vmatprep.subr.mxu0 0.0
    %1348 = vmatpush1.msra.mxu0 0.0
    %1349 = vmatprep.subr.mxu0 0.0
    %1350 = vmatpush1.msra.mxu0 0.0
    %1351 = vmatprep.subr.mxu0 0.0
    %1352 = vmatpush1.msra.mxu0 0.0
    %1353 = vmatprep.subr.mxu0 0.0
    %1354 = vmatpush1.msra.mxu0 0.0
    %1355 = vmatprep.subr.mxu0 0.0
    %1356 = vmatpush1.msra.mxu0 0.0
    %1357 = vmatprep.subr.mxu0 0.0
    %1358 = vmatpush1.msra.mxu0 0.0
    %1359 = vmatprep.subr.mxu0 0.0
    %1360 = vmatpush1.msra.mxu0 0.0
    %1361 = vmatprep.subr.mxu0 0.0
    %1362 = vmatpush1.msra.mxu0 0.0
    %1363 = vmatprep.subr.mxu0 0.0
    %1364 = vmatpush1.msra.mxu0 0.0
    %1365 = vmatprep.subr.mxu0 0.0
    %1366 = vmatpush1.msra.mxu0 0.0
    %1367 = vmatprep.subr.mxu0 0.0
    %1368 = vmatpush1.msra.mxu0 0.0
    %1369 = vmatprep.subr.mxu0 0.0
    %1370 = vmatpush1.msra.mxu0 0.0
    %1371 = vmatprep.subr.mxu0 0.0
    %1372 = vmatpush1.msra.mxu0 0.0
    %1373 = vmatprep.subr.mxu0 0.0
    %1374 = vmatpush1.msra.mxu0 0.0
    %1375 = vmatprep.subr.mxu0 0.0
    %1376 = vmatpush1.msra.mxu0 0.0
    %1377 = vmatprep.mubr.f32.mxu0 0.0
    %1378 = vmatmul.mubr.f32.gmra.mrb[0].mxu0 %v1304
    %v1379 = vpop.f32.mrb[0].mxu0
    %v1380 = vadd.f32 %v452, %v1379
    %v1381 = vpop.f32.mrb[0].mxu0
    %v1382 = vadd.f32 %v456, %v1381
    %1383 = vdwg.mxu0
    %1384 = vmatprep.subr.mxu0 0.0
    %1385 = vmatpush1.msra.mxu0 %v394
    %1386 = vmatprep.subr.mxu0 0.0
    %1387 = vmatpush1.msra.mxu0 %v397
    %1388 = vmatprep.subr.mxu0 0.0
    %1389 = vmatpush1.msra.mxu0 %v400
    %1390 = vmatprep.subr.mxu0 0.0
    %1391 = vmatpush1.msra.mxu0 %v403
    %1392 = vmatprep.subr.mxu0 0.0
    %1393 = vmatpush1.msra.mxu0 %v406
    %1394 = vmatprep.subr.mxu0 0.0
    %1395 = vmatpush1.msra.mxu0 %v409
    %1396 = vmatprep.subr.mxu0 0.0
    %1397 = vmatpush1.msra.mxu0 %v412
    %1398 = vmatprep.subr.mxu0 0.0
    %1399 = vmatpush1.msra.mxu0 %v415
    %1400 = vmatprep.subr.mxu0 0.0
    %1401 = vmatpush1.msra.mxu0 %v418
    %1402 = vmatprep.subr.mxu0 0.0
    %1403 = vmatpush1.msra.mxu0 %v421
    %1404 = vmatprep.subr.mxu0 0.0
    %1405 = vmatpush1.msra.mxu0 %v424
    %1406 = vmatprep.subr.mxu0 0.0
    %1407 = vmatpush1.msra.mxu0 %v427
    %1408 = vmatprep.subr.mxu0 0.0
    %1409 = vmatpush1.msra.mxu0 %v430
    %1410 = vmatprep.subr.mxu0 0.0
    %1411 = vmatpush1.msra.mxu0 %v433
    %1412 = vmatprep.subr.mxu0 0.0
    %1413 = vmatpush1.msra.mxu0 %v436
    %1414 = vmatprep.subr.mxu0 0.0
    %1415 = vmatpush1.msra.mxu0 %v439
    %1416 = vmatprep.subr.mxu0 0.0
    %1417 = vmatpush1.msra.mxu0 0.0
    %1418 = vmatprep.subr.mxu0 0.0
    %1419 = vmatpush1.msra.mxu0 0.0
    %1420 = vmatprep.subr.mxu0 0.0
    %1421 = vmatpush1.msra.mxu0 0.0
    %1422 = vmatprep.subr.mxu0 0.0
    %1423 = vmatpush1.msra.mxu0 0.0
    %1424 = vmatprep.subr.mxu0 0.0
    %1425 = vmatpush1.msra.mxu0 0.0
    %1426 = vmatprep.subr.mxu0 0.0
    %1427 = vmatpush1.msra.mxu0 0.0
    %1428 = vmatprep.subr.mxu0 0.0
    %1429 = vmatpush1.msra.mxu0 0.0
    %1430 = vmatprep.subr.mxu0 0.0
    %1431 = vmatpush1.msra.mxu0 0.0
    %1432 = vmatprep.subr.mxu0 0.0
    %1433 = vmatpush1.msra.mxu0 0.0
    %1434 = vmatprep.subr.mxu0 0.0
    %1435 = vmatpush1.msra.mxu0 0.0
    %1436 = vmatprep.subr.mxu0 0.0
    %1437 = vmatpush1.msra.mxu0 0.0
    %1438 = vmatprep.subr.mxu0 0.0
    %1439 = vmatpush1.msra.mxu0 0.0
    %1440 = vmatprep.subr.mxu0 0.0
    %1441 = vmatpush1.msra.mxu0 0.0
    %1442 = vmatprep.subr.mxu0 0.0
    %1443 = vmatpush1.msra.mxu0 0.0
    %1444 = vmatprep.subr.mxu0 0.0
    %1445 = vmatpush1.msra.mxu0 0.0
    %1446 = vmatprep.subr.mxu0 0.0
    %1447 = vmatpush1.msra.mxu0 0.0
    %1448 = vmatprep.mubr.f32.mxu0 0.0
    %1449 = vmatmul.mubr.f32.gmra.mrb[0].mxu0 %v1304
    %v1450 = vpop.f32.mrb[0].mxu0
    %v1451 = vadd.f32 %v460, %v1450
    %v1452 = vpop.f32.mrb[0].mxu0
    %1453 = vdwg.mxu0
    %v1454 = vadd.f32 %v1310, %v1380
    %v1455 = vxor.u32 %v1454, 2147483648
    %v1456 = vmul.f32 %v1455, 1.442695
    %v1457 = vpow.pop %v1456
    %v1458 = vadd.f32 %v1457, 1.0
    %v1459 = vrcp.pop %v1458
    %v1460 = vmul.f32 1.0, %v1459
    %v1461 = vadd.f32 %v1311, %v1382
    %v1462 = vxor.u32 %v1461, 2147483648
    %v1463 = vmul.f32 %v1462, 1.442695
    %v1464 = vpow.pop %v1463
    %v1465 = vadd.f32 %v1464, 1.0
    %v1466 = vrcp.pop %v1465
    %v1467 = vmul.f32 1.0, %v1466
    %v1468 = vmul.f32 %v1460, %v1451
    %v1469 = vadd.f32 %v1312, %v1468
    %v1470 = vtanh.pop %v1469
    %v1471 = vsub.f32 1.0, %v1467
    %v1472 = vmul.f32 %v1471, %v1470
    %v1473 = vmul.f32 %v1467, %v1304
    %v1474 = vadd.f32 %v1472, %v1473
    %s1475 = scalar_lea.vmem [#allocation11], 40
    %1476 = vst [vmem:[%s1475] sm:$0xff] %v1474
    %s1477 = smul.u32 6, 3
    %s1478 = smul.addr %s1477, 8
    %s1479 = scalar_lea.vmem [#allocation2], %s1478
    %v1480 = vld [vmem:[%s1479] sm:$0xff]
    %v1481 = vld [vmem:[%s1479 + $0x8] sm:$0xff]
    %v1482 = vld [vmem:[%s1479 + $0x10] sm:$0xff]
    %1483 = vmatprep.subr.mxu0 %v393
    %1484 = vmatpush1.msra.mxu0 %v392
    %1485 = vmatprep.subr.mxu0 %v396
    %1486 = vmatpush1.msra.mxu0 %v395
    %1487 = vmatprep.subr.mxu0 %v399
    %1488 = vmatpush1.msra.mxu0 %v398
    %1489 = vmatprep.subr.mxu0 %v402
    %1490 = vmatpush1.msra.mxu0 %v401
    %1491 = vmatprep.subr.mxu0 %v405
    %1492 = vmatpush1.msra.mxu0 %v404
    %1493 = vmatprep.subr.mxu0 %v408
    %1494 = vmatpush1.msra.mxu0 %v407
    %1495 = vmatprep.subr.mxu0 %v411
    %1496 = vmatpush1.msra.mxu0 %v410
    %1497 = vmatprep.subr.mxu0 %v414
    %1498 = vmatpush1.msra.mxu0 %v413
    %1499 = vmatprep.subr.mxu0 %v417
    %1500 = vmatpush1.msra.mxu0 %v416
    %1501 = vmatprep.subr.mxu0 %v420
    %1502 = vmatpush1.msra.mxu0 %v419
    %1503 = vmatprep.subr.mxu0 %v423
    %1504 = vmatpush1.msra.mxu0 %v422
    %1505 = vmatprep.subr.mxu0 %v426
    %1506 = vmatpush1.msra.mxu0 %v425
    %1507 = vmatprep.subr.mxu0 %v429
    %1508 = vmatpush1.msra.mxu0 %v428
    %1509 = vmatprep.subr.mxu0 %v432
    %1510 = vmatpush1.msra.mxu0 %v431
    %1511 = vmatprep.subr.mxu0 %v435
    %1512 = vmatpush1.msra.mxu0 %v434
    %1513 = vmatprep.subr.mxu0 %v438
    %1514 = vmatpush1.msra.mxu0 %v437
    %1515 = vmatprep.subr.mxu0 0.0
    %1516 = vmatpush1.msra.mxu0 0.0
    %1517 = vmatprep.subr.mxu0 0.0
    %1518 = vmatpush1.msra.mxu0 0.0
    %1519 = vmatprep.subr.mxu0 0.0
    %1520 = vmatpush1.msra.mxu0 0.0
    %1521 = vmatprep.subr.mxu0 0.0
    %1522 = vmatpush1.msra.mxu0 0.0
    %1523 = vmatprep.subr.mxu0 0.0
    %1524 = vmatpush1.msra.mxu0 0.0
    %1525 = vmatprep.subr.mxu0 0.0
    %1526 = vmatpush1.msra.mxu0 0.0
    %1527 = vmatprep.subr.mxu0 0.0
    %1528 = vmatpush1.msra.mxu0 0.0
    %1529 = vmatprep.subr.mxu0 0.0
    %1530 = vmatpush1.msra.mxu0 0.0
    %1531 = vmatprep.subr.mxu0 0.0
    %1532 = vmatpush1.msra.mxu0 0.0
    %1533 = vmatprep.subr.mxu0 0.0
    %1534 = vmatpush1.msra.mxu0 0.0
    %1535 = vmatprep.subr.mxu0 0.0
    %1536 = vmatpush1.msra.mxu0 0.0
    %1537 = vmatprep.subr.mxu0 0.0
    %1538 = vmatpush1.msra.mxu0 0.0
    %1539 = vmatprep.subr.mxu0 0.0
    %1540 = vmatpush1.msra.mxu0 0.0
    %1541 = vmatprep.subr.mxu0 0.0
    %1542 = vmatpush1.msra.mxu0 0.0
    %1543 = vmatprep.subr.mxu0 0.0
    %1544 = vmatpush1.msra.mxu0 0.0
    %1545 = vmatprep.subr.mxu0 0.0
    %1546 = vmatpush1.msra.mxu0 0.0
    %1547 = vmatprep.mubr.f32.mxu0 0.0
    %1548 = vmatmul.mubr.f32.gmra.mrb[0].mxu0 %v1474
    %v1549 = vpop.f32.mrb[0].mxu0
    %v1550 = vadd.f32 %v452, %v1549
    %v1551 = vpop.f32.mrb[0].mxu0
    %v1552 = vadd.f32 %v456, %v1551
    %1553 = vdwg.mxu0
    %1554 = vmatprep.subr.mxu0 0.0
    %1555 = vmatpush1.msra.mxu0 %v394
    %1556 = vmatprep.subr.mxu0 0.0
    %1557 = vmatpush1.msra.mxu0 %v397
    %1558 = vmatprep.subr.mxu0 0.0
    %1559 = vmatpush1.msra.mxu0 %v400
    %1560 = vmatprep.subr.mxu0 0.0
    %1561 = vmatpush1.msra.mxu0 %v403
    %1562 = vmatprep.subr.mxu0 0.0
    %1563 = vmatpush1.msra.mxu0 %v406
    %1564 = vmatprep.subr.mxu0 0.0
    %1565 = vmatpush1.msra.mxu0 %v409
    %1566 = vmatprep.subr.mxu0 0.0
    %1567 = vmatpush1.msra.mxu0 %v412
    %1568 = vmatprep.subr.mxu0 0.0
    %1569 = vmatpush1.msra.mxu0 %v415
    %1570 = vmatprep.subr.mxu0 0.0
    %1571 = vmatpush1.msra.mxu0 %v418
    %1572 = vmatprep.subr.mxu0 0.0
    %1573 = vmatpush1.msra.mxu0 %v421
    %1574 = vmatprep.subr.mxu0 0.0
    %1575 = vmatpush1.msra.mxu0 %v424
    %1576 = vmatprep.subr.mxu0 0.0
    %1577 = vmatpush1.msra.mxu0 %v427
    %1578 = vmatprep.subr.mxu0 0.0
    %1579 = vmatpush1.msra.mxu0 %v430
    %1580 = vmatprep.subr.mxu0 0.0
    %1581 = vmatpush1.msra.mxu0 %v433
    %1582 = vmatprep.subr.mxu0 0.0
    %1583 = vmatpush1.msra.mxu0 %v436
    %1584 = vmatprep.subr.mxu0 0.0
    %1585 = vmatpush1.msra.mxu0 %v439
    %1586 = vmatprep.subr.mxu0 0.0
    %1587 = vmatpush1.msra.mxu0 0.0
    %1588 = vmatprep.subr.mxu0 0.0
    %1589 = vmatpush1.msra.mxu0 0.0
    %1590 = vmatprep.subr.mxu0 0.0
    %1591 = vmatpush1.msra.mxu0 0.0
    %1592 = vmatprep.subr.mxu0 0.0
    %1593 = vmatpush1.msra.mxu0 0.0
    %1594 = vmatprep.subr.mxu0 0.0
    %1595 = vmatpush1.msra.mxu0 0.0
    %1596 = vmatprep.subr.mxu0 0.0
    %1597 = vmatpush1.msra.mxu0 0.0
    %1598 = vmatprep.subr.mxu0 0.0
    %1599 = vmatpush1.msra.mxu0 0.0
    %1600 = vmatprep.subr.mxu0 0.0
    %1601 = vmatpush1.msra.mxu0 0.0
    %1602 = vmatprep.subr.mxu0 0.0
    %1603 = vmatpush1.msra.mxu0 0.0
    %1604 = vmatprep.subr.mxu0 0.0
    %1605 = vmatpush1.msra.mxu0 0.0
    %1606 = vmatprep.subr.mxu0 0.0
    %1607 = vmatpush1.msra.mxu0 0.0
    %1608 = vmatprep.subr.mxu0 0.0
    %1609 = vmatpush1.msra.mxu0 0.0
    %1610 = vmatprep.subr.mxu0 0.0
    %1611 = vmatpush1.msra.mxu0 0.0
    %1612 = vmatprep.subr.mxu0 0.0
    %1613 = vmatpush1.msra.mxu0 0.0
    %1614 = vmatprep.subr.mxu0 0.0
    %1615 = vmatpush1.msra.mxu0 0.0
    %1616 = vmatprep.subr.mxu0 0.0
    %1617 = vmatpush1.msra.mxu0 0.0
    %1618 = vmatprep.mubr.f32.mxu0 0.0
    %1619 = vmatmul.mubr.f32.gmra.mrb[0].mxu0 %v1474
    %v1620 = vpop.f32.mrb[0].mxu0
    %v1621 = vadd.f32 %v460, %v1620
    %v1622 = vpop.f32.mrb[0].mxu0
    %1623 = vdwg.mxu0
    %v1624 = vadd.f32 %v1480, %v1550
    %v1625 = vxor.u32 %v1624, 2147483648
    %v1626 = vmul.f32 %v1625, 1.442695
    %v1627 = vpow.pop %v1626
    %v1628 = vadd.f32 %v1627, 1.0
    %v1629 = vrcp.pop %v1628
    %v1630 = vmul.f32 1.0, %v1629
    %v1631 = vadd.f32 %v1481, %v1552
    %v1632 = vxor.u32 %v1631, 2147483648
    %v1633 = vmul.f32 %v1632, 1.442695
    %v1634 = vpow.pop %v1633
    %v1635 = vadd.f32 %v1634, 1.0
    %v1636 = vrcp.pop %v1635
    %v1637 = vmul.f32 1.0, %v1636
    %v1638 = vmul.f32 %v1630, %v1621
    %v1639 = vadd.f32 %v1482, %v1638
    %v1640 = vtanh.pop %v1639
    %v1641 = vsub.f32 1.0, %v1637
    %v1642 = vmul.f32 %v1641, %v1640
    %v1643 = vmul.f32 %v1637, %v1474
    %v1644 = vadd.f32 %v1642, %v1643
    %s1645 = scalar_lea.vmem [#allocation11], 48
    %1646 = vst [vmem:[%s1645] sm:$0xff] %v1644
    %s1647 = smul.u32 7, 3
    %s1648 = smul.addr %s1647, 8
    %s1649 = scalar_lea.vmem [#allocation2], %s1648
    %v1650 = vld [vmem:[%s1649] sm:$0xff]
    %v1651 = vld [vmem:[%s1649 + $0x8] sm:$0xff]
    %v1652 = vld [vmem:[%s1649 + $0x10] sm:$0xff]
    %1653 = vmatprep.subr.mxu0 %v393
    %1654 = vmatpush1.msra.mxu0 %v392
    %1655 = vmatprep.subr.mxu0 %v396
    %1656 = vmatpush1.msra.mxu0 %v395
    %1657 = vmatprep.subr.mxu0 %v399
    %1658 = vmatpush1.msra.mxu0 %v398
    %1659 = vmatprep.subr.mxu0 %v402
    %1660 = vmatpush1.msra.mxu0 %v401
    %1661 = vmatprep.subr.mxu0 %v405
    %1662 = vmatpush1.msra.mxu0 %v404
    %1663 = vmatprep.subr.mxu0 %v408
    %1664 = vmatpush1.msra.mxu0 %v407
    %1665 = vmatprep.subr.mxu0 %v411
    %1666 = vmatpush1.msra.mxu0 %v410
    %1667 = vmatprep.subr.mxu0 %v414
    %1668 = vmatpush1.msra.mxu0 %v413
    %1669 = vmatprep.subr.mxu0 %v417
    %1670 = vmatpush1.msra.mxu0 %v416
    %1671 = vmatprep.subr.mxu0 %v420
    %1672 = vmatpush1.msra.mxu0 %v419
    %1673 = vmatprep.subr.mxu0 %v423
    %1674 = vmatpush1.msra.mxu0 %v422
    %1675 = vmatprep.subr.mxu0 %v426
    %1676 = vmatpush1.msra.mxu0 %v425
    %1677 = vmatprep.subr.mxu0 %v429
    %1678 = vmatpush1.msra.mxu0 %v428
    %1679 = vmatprep.subr.mxu0 %v432
    %1680 = vmatpush1.msra.mxu0 %v431
    %1681 = vmatprep.subr.mxu0 %v435
    %1682 = vmatpush1.msra.mxu0 %v434
    %1683 = vmatprep.subr.mxu0 %v438
    %1684 = vmatpush1.msra.mxu0 %v437
    %1685 = vmatprep.subr.mxu0 0.0
    %1686 = vmatpush1.msra.mxu0 0.0
    %1687 = vmatprep.subr.mxu0 0.0
    %1688 = vmatpush1.msra.mxu0 0.0
    %1689 = vmatprep.subr.mxu0 0.0
    %1690 = vmatpush1.msra.mxu0 0.0
    %1691 = vmatprep.subr.mxu0 0.0
    %1692 = vmatpush1.msra.mxu0 0.0
    %1693 = vmatprep.subr.mxu0 0.0
    %1694 = vmatpush1.msra.mxu0 0.0
    %1695 = vmatprep.subr.mxu0 0.0
    %1696 = vmatpush1.msra.mxu0 0.0
    %1697 = vmatprep.subr.mxu0 0.0
    %1698 = vmatpush1.msra.mxu0 0.0
    %1699 = vmatprep.subr.mxu0 0.0
    %1700 = vmatpush1.msra.mxu0 0.0
    %1701 = vmatprep.subr.mxu0 0.0
    %1702 = vmatpush1.msra.mxu0 0.0
    %1703 = vmatprep.subr.mxu0 0.0
    %1704 = vmatpush1.msra.mxu0 0.0
    %1705 = vmatprep.subr.mxu0 0.0
    %1706 = vmatpush1.msra.mxu0 0.0
    %1707 = vmatprep.subr.mxu0 0.0
    %1708 = vmatpush1.msra.mxu0 0.0
    %1709 = vmatprep.subr.mxu0 0.0
    %1710 = vmatpush1.msra.mxu0 0.0
    %1711 = vmatprep.subr.mxu0 0.0
    %1712 = vmatpush1.msra.mxu0 0.0
    %1713 = vmatprep.subr.mxu0 0.0
    %1714 = vmatpush1.msra.mxu0 0.0
    %1715 = vmatprep.subr.mxu0 0.0
    %1716 = vmatpush1.msra.mxu0 0.0
    %1717 = vmatprep.mubr.f32.mxu0 0.0
    %1718 = vmatmul.mubr.f32.gmra.mrb[0].mxu0 %v1644
    %v1719 = vpop.f32.mrb[0].mxu0
    %v1720 = vadd.f32 %v452, %v1719
    %v1721 = vpop.f32.mrb[0].mxu0
    %v1722 = vadd.f32 %v456, %v1721
    %1723 = vdwg.mxu0
    %1724 = vmatprep.subr.mxu0 0.0
    %1725 = vmatpush1.msra.mxu0 %v394
    %1726 = vmatprep.subr.mxu0 0.0
    %1727 = vmatpush1.msra.mxu0 %v397
    %1728 = vmatprep.subr.mxu0 0.0
    %1729 = vmatpush1.msra.mxu0 %v400
    %1730 = vmatprep.subr.mxu0 0.0
    %1731 = vmatpush1.msra.mxu0 %v403
    %1732 = vmatprep.subr.mxu0 0.0
    %1733 = vmatpush1.msra.mxu0 %v406
    %1734 = vmatprep.subr.mxu0 0.0
    %1735 = vmatpush1.msra.mxu0 %v409
    %1736 = vmatprep.subr.mxu0 0.0
    %1737 = vmatpush1.msra.mxu0 %v412
    %1738 = vmatprep.subr.mxu0 0.0
    %1739 = vmatpush1.msra.mxu0 %v415
    %1740 = vmatprep.subr.mxu0 0.0
    %1741 = vmatpush1.msra.mxu0 %v418
    %1742 = vmatprep.subr.mxu0 0.0
    %1743 = vmatpush1.msra.mxu0 %v421
    %1744 = vmatprep.subr.mxu0 0.0
    %1745 = vmatpush1.msra.mxu0 %v424
    %1746 = vmatprep.subr.mxu0 0.0
    %1747 = vmatpush1.msra.mxu0 %v427
    %1748 = vmatprep.subr.mxu0 0.0
    %1749 = vmatpush1.msra.mxu0 %v430
    %1750 = vmatprep.subr.mxu0 0.0
    %1751 = vmatpush1.msra.mxu0 %v433
    %1752 = vmatprep.subr.mxu0 0.0
    %1753 = vmatpush1.msra.mxu0 %v436
    %1754 = vmatprep.subr.mxu0 0.0
    %1755 = vmatpush1.msra.mxu0 %v439
    %1756 = vmatprep.subr.mxu0 0.0
    %1757 = vmatpush1.msra.mxu0 0.0
    %1758 = vmatprep.subr.mxu0 0.0
    %1759 = vmatpush1.msra.mxu0 0.0
    %1760 = vmatprep.subr.mxu0 0.0
    %1761 = vmatpush1.msra.mxu0 0.0
    %1762 = vmatprep.subr.mxu0 0.0
    %1763 = vmatpush1.msra.mxu0 0.0
    %1764 = vmatprep.subr.mxu0 0.0
    %1765 = vmatpush1.msra.mxu0 0.0
    %1766 = vmatprep.subr.mxu0 0.0
    %1767 = vmatpush1.msra.mxu0 0.0
    %1768 = vmatprep.subr.mxu0 0.0
    %1769 = vmatpush1.msra.mxu0 0.0
    %1770 = vmatprep.subr.mxu0 0.0
    %1771 = vmatpush1.msra.mxu0 0.0
    %1772 = vmatprep.subr.mxu0 0.0
    %1773 = vmatpush1.msra.mxu0 0.0
    %1774 = vmatprep.subr.mxu0 0.0
    %1775 = vmatpush1.msra.mxu0 0.0
    %1776 = vmatprep.subr.mxu0 0.0
    %1777 = vmatpush1.msra.mxu0 0.0
    %1778 = vmatprep.subr.mxu0 0.0
    %1779 = vmatpush1.msra.mxu0 0.0
    %1780 = vmatprep.subr.mxu0 0.0
    %1781 = vmatpush1.msra.mxu0 0.0
    %1782 = vmatprep.subr.mxu0 0.0
    %1783 = vmatpush1.msra.mxu0 0.0
    %1784 = vmatprep.subr.mxu0 0.0
    %1785 = vmatpush1.msra.mxu0 0.0
    %1786 = vmatprep.subr.mxu0 0.0
    %1787 = vmatpush1.msra.mxu0 0.0
    %1788 = vmatprep.mubr.f32.mxu0 0.0
    %1789 = vmatmul.mubr.f32.gmra.mrb[0].mxu0 %v1644
    %v1790 = vpop.f32.mrb[0].mxu0
    %v1791 = vadd.f32 %v460, %v1790
    %v1792 = vpop.f32.mrb[0].mxu0
    %1793 = vdwg.mxu0
    %v1794 = vadd.f32 %v1650, %v1720
    %v1795 = vxor.u32 %v1794, 2147483648
    %v1796 = vmul.f32 %v1795, 1.442695
    %v1797 = vpow.pop %v1796
    %v1798 = vadd.f32 %v1797, 1.0
    %v1799 = vrcp.pop %v1798
    %v1800 = vmul.f32 1.0, %v1799
    %v1801 = vadd.f32 %v1651, %v1722
    %v1802 = vxor.u32 %v1801, 2147483648
    %v1803 = vmul.f32 %v1802, 1.442695
    %v1804 = vpow.pop %v1803
    %v1805 = vadd.f32 %v1804, 1.0
    %v1806 = vrcp.pop %v1805
    %v1807 = vmul.f32 1.0, %v1806
    %v1808 = vmul.f32 %v1800, %v1791
    %v1809 = vadd.f32 %v1652, %v1808
    %v1810 = vtanh.pop %v1809
    %v1811 = vsub.f32 1.0, %v1807
    %v1812 = vmul.f32 %v1811, %v1810
    %v1813 = vmul.f32 %v1807, %v1644
    %v1814 = vadd.f32 %v1812, %v1813
    %s1815 = scalar_lea.vmem [#allocation11], 56
    %1816 = vst [vmem:[%s1815] sm:$0xff] %v1814
    // Predicated region
    $region42: #{tpu_custom_call.1} parent=1 // pred_check
      _
    $region43: #{tpu_custom_call.1} parent=1 // pred_check_branch
      %1818 = sbr.rel (0) target = $region45
    $region44: #{tpu_custom_call.1} parent=1 // pred_region
      %s1820 = ssub.s32 1024, 1024
      %1821 = vsyncadd [#allocation5], %s1820
      %s1822 = sshll.u32 [#allocation11], 4
      %s1823 = int_to_ptr.vmem [resolvable:$true] %s1822
      %1828 = dma.vmem_to_hbm [thread:$0]  %s1823, 1024, %s6, [#allocation5], 128, 128, 8
    $region45: #{tpu_custom_call.1} parent=1 // pred_fallthru
      _
    // Predicated region
    $region46: #{tpu_custom_call.1} parent=1 // pred_check
      _
    $region47: #{tpu_custom_call.1} parent=1 // pred_check_branch
      %1830 = sbr.rel (0) target = $region49
    $region48: #{tpu_custom_call.1} parent=1 // pred_region
      %1831 = dma.done [#allocation5], 1024
    $region49: #{tpu_custom_call.1} parent=1 // pred_fallthru
      _
    %1832 = vsyncpa [#allocation4], 1
    %1833 = vsyncpa [#allocation7], 1
    %1834 = vsyncpa [#allocation10], 1
    %1835 = vsyncpa [#allocation5], 1

</llo_original>
